<compile_context>
chip_gen: v7x
topology: tpu7x:2x2x1
jax: 0.10.0
libtpu: 0.0.40
codegen_flags: <defaults>
</compile_context>

<pallas_src>
import functools

import jax
import jax.numpy as jnp
from jax import lax
from jax.experimental import pallas as pl
from jax.experimental.pallas import tpu as pltpu


def _round_up(n, m):
  return ((n + m - 1) // m) * m


def _pad_gate_cols(w, h, hp):
  """Zero-pad the 4 gate column-blocks [i|f|g|o] (width h each) to width hp."""
  if h == hp:
    return w
  rows = w.shape[0]
  w4 = w.reshape(rows, 4, h)
  out = jnp.zeros((rows, 4, hp), w.dtype).at[:, :, :h].set(w4)
  return out.reshape(rows, 4 * hp)


def _lstm_layer_kernel(x_ref, wih_ref, whh_ref, b_ref, h0_ref, c0_ref,
                       out_ref, hn_ref, cn_ref, h_sc, c_sc, gx_sc,
                       *, hidden_pad, time_chunk, unroll):
  """One grid step = `time_chunk` timesteps of the LSTM recurrence."""
  Hp = hidden_pad
  TT = time_chunk
  Bp = h_sc.shape[0]
  c_idx = pl.program_id(0)

  @pl.when(c_idx == 0)
  def _():
    h_sc[...] = h0_ref[...]          # f32 carries
    c_sc[...] = c0_ref[...]

  # Hoisted input projection (+ folded bias) for the whole chunk:
  # (TT*Bp, Din) @ (Din, 4Hp) -> (TT*Bp, 4Hp) as ONE large-M MXU matmul
  # (compute-dtype operands, f32 accumulation), staged in f32 VMEM scratch so
  # the serial recurrence consumes one (Bp, 4Hp) slab per timestep with no
  # per-step bias broadcast.
  gates_x = jnp.dot(x_ref[...].astype(wih_ref.dtype), wih_ref[...],
                    preferred_element_type=jnp.float32)
  gx_sc[...] = gates_x + b_ref[...].astype(jnp.float32)

  w_hh = whh_ref[...]   # loaded once, loop-invariant

  def step(i, carry):
    h_prev, c_prev = carry
    row = pl.multiple_of(i * Bp, Bp)   # sublane-aligned dynamic slab start
    gates = gx_sc[pl.ds(row, Bp), :] + jnp.dot(
        h_prev.astype(w_hh.dtype), w_hh, preferred_element_type=jnp.float32)
    # Each gate slab [i|f|g|o] starts on a 128-lane boundary (Hp % 128 == 0).
    i_g = jax.nn.sigmoid(gates[:, 0 * Hp:1 * Hp])
    f_g = jax.nn.sigmoid(gates[:, 1 * Hp:2 * Hp])
    g_g = jnp.tanh(gates[:, 2 * Hp:3 * Hp])
    o_g = jax.nn.sigmoid(gates[:, 3 * Hp:4 * Hp])
    c_new = f_g * c_prev + i_g * g_g
    h_new = o_g * jnp.tanh(c_new)
    out_ref[i] = h_new.astype(out_ref.dtype)   # lane-dense (Bp, Hp) store
    return h_new, c_new

  # Moderate unroll bounds vreg live ranges (vs. a full static unroll) while
  # keeping LLO scheduling visibility on the serial critical path.
  h_last, c_last = lax.fori_loop(0, TT, step, (h_sc[...], c_sc[...]),
                                 unroll=unroll)
  h_sc[...] = h_last
  c_sc[...] = c_last

  @pl.when(c_idx == pl.num_programs(0) - 1)
  def _():
    # h_n/c_n have constant index_maps -> resident outputs, flushed once at
    # the end of the grid.
    hn_ref[...] = h_last.astype(hn_ref.dtype)
    cn_ref[...] = c_last.astype(cn_ref.dtype)


def _vmem_bytes(tt, bp, din, hp, cbytes, obytes):
  """VMEM footprint estimate for one layer's pallas_call (double-buffered)."""
  gp = 4 * hp
  total = 2 * din * gp * cbytes          # W_ih   (x2 pipeline buffers)
  total += 2 * hp * gp * cbytes          # W_hh
  total += 2 * 8 * gp * 4                # bias (1 row -> 8 sublanes), f32
  total += 2 * 2 * bp * hp * 4           # h0, c0 (f32)
  total += 2 * 2 * bp * hp * 4           # h_n, c_n outputs (f32)
  total += 2 * bp * hp * 4               # h/c carry scratch
  total += tt * bp * gp * 4              # gate-slab staging scratch (f32)
  total += 2 * tt * bp * din * cbytes    # x chunk
  total += 2 * tt * bp * hp * obytes     # out chunk
  return total


def _vmem_capacity_bytes():
  try:
    return int(pltpu.get_tpu_info().vmem_capacity_bytes)
  except Exception:
    return 64 * 1024 * 1024   # conservative default (v7x per-core VMEM)


def lstm_layer(x_p, w_ih_p, w_hh_p, bias_p, h0_p, c0_p, *, time_chunk=None):
  """One LSTM layer over a batch-padded, lane-padded sequence.

  x_p:        (T, Bp, Din)  compute dtype
  w_ih_p:     (Din, 4*Hp)   compute dtype; gate slabs [i|f|g|o], zero pads
  w_hh_p:     (Hp, 4*Hp)    compute dtype; zero-padded rows & columns
  bias_p:     (1, 4*Hp)     float32; zero-padded columns
  h0_p, c0_p: (Bp, Hp)      float32; zero-padded rows & lanes
  Returns out (T, Bp, Hp) compute dtype, h_n (Bp, Hp) f32, c_n (Bp, Hp) f32.
  """
  T, Bp, Din = x_p.shape
  Hp = h0_p.shape[-1]
  cdt = x_p.dtype
  cbytes = jnp.dtype(cdt).itemsize
  obytes = cbytes

  cap = _vmem_capacity_bytes()
  budget = int(0.7 * cap)

  if time_chunk is None:
    # Largest chunk (<= 64 steps) that divides T and fits the VMEM budget:
    # amortizes per-grid-step overhead and maximizes M = TT*Bp of the hoisted
    # input projection (>= 256 rows on v6e/v7x whenever T/B allow).
    tt = 1
    for cand in range(min(T, 64), 0, -1):
      if T % cand:
        continue
      if _vmem_bytes(cand, Bp, Din, Hp, cbytes, obytes) <= budget:
        tt = cand
        break
  else:
    tt = time_chunk
    assert T % tt == 0, "time_chunk must divide the sequence length"

  est = _vmem_bytes(tt, Bp, Din, Hp, cbytes, obytes)
  vmem_limit = max(int(est * 1.4) + (4 << 20), 32 << 20)
  vmem_limit = min(vmem_limit, int(0.9 * cap))

  unroll = min(tt, 8)
  kernel = functools.partial(_lstm_layer_kernel, hidden_pad=Hp,
                             time_chunk=tt, unroll=unroll)

  # Present x as a lane/sublane-dense (T*Bp, Din) slab: the kernel's input
  # projection is a single 2-D matmul with M = TT*Bp rows per grid step.
  x2 = x_p.reshape(T * Bp, Din)

  out_shapes = (
      jax.ShapeDtypeStruct((T, Bp, Hp), cdt),       # per-step hidden outputs
      jax.ShapeDtypeStruct((Bp, Hp), jnp.float32),  # h_n
      jax.ShapeDtypeStruct((Bp, Hp), jnp.float32),  # c_n
  )
  grid_spec = pltpu.PrefetchScalarGridSpec(
      num_scalar_prefetch=0,
      grid=(T // tt,),
      in_specs=[
          pl.BlockSpec((tt * Bp, Din), lambda c: (c, 0)),    # x chunk
          pl.BlockSpec((Din, 4 * Hp), lambda c: (0, 0)),     # W_ih (resident)
          pl.BlockSpec((Hp, 4 * Hp), lambda c: (0, 0)),      # W_hh (resident)
          pl.BlockSpec((1, 4 * Hp), lambda c: (0, 0)),       # bias (resident)
          pl.BlockSpec((Bp, Hp), lambda c: (0, 0)),          # h0
          pl.BlockSpec((Bp, Hp), lambda c: (0, 0)),          # c0
      ],
      out_specs=[
          pl.BlockSpec((tt, Bp, Hp), lambda c: (c, 0, 0)),   # out chunk
          pl.BlockSpec((Bp, Hp), lambda c: (0, 0)),          # h_n (resident)
          pl.BlockSpec((Bp, Hp), lambda c: (0, 0)),          # c_n (resident)
      ],
      scratch_shapes=[
          pltpu.VMEM((Bp, Hp), jnp.float32),            # h carry
          pltpu.VMEM((Bp, Hp), jnp.float32),            # c carry
          pltpu.VMEM((tt * Bp, 4 * Hp), jnp.float32),   # gate-slab staging
      ],
  )
  out, hn, cn = pl.pallas_call(
      kernel,
      out_shape=out_shapes,
      grid_spec=grid_spec,
      compiler_params=pltpu.CompilerParams(
          dimension_semantics=("arbitrary",),   # time is a true recurrence
          vmem_limit_bytes=int(vmem_limit)),
  )(x2, w_ih_p, w_hh_p, bias_p, h0_p, c0_p)
  return out, hn, cn


def init_lstm_params(key, input_size, hidden_size, num_layers):
  """Deterministic parameter init, PyTorch-style U(-1/sqrt(H), 1/sqrt(H))."""
  params = []
  bound = 1.0 / (hidden_size ** 0.5)
  for layer in range(num_layers):
    d = input_size if layer == 0 else hidden_size
    key, k1, k2, k3, k4 = jax.random.split(key, 5)
    w_ih = jax.random.uniform(k1, (d, 4 * hidden_size), jnp.float32, -bound, bound)
    w_hh = jax.random.uniform(k2, (hidden_size, 4 * hidden_size), jnp.float32, -bound, bound)
    b_ih = jax.random.uniform(k3, (1, 4 * hidden_size), jnp.float32, -bound, bound)
    b_hh = jax.random.uniform(k4, (1, 4 * hidden_size), jnp.float32, -bound, bound)
    params.append((w_ih, w_hh, b_ih + b_hh))
  return params


def lstm_forward(params, x, hidden, *, compute_dtype=jnp.bfloat16):
  """Multi-layer LSTM forward (seq-first), matching the reference module.

  x: (T, B, input_size); hidden = (h0, c0) each (num_layers, B, H).
  compute_dtype: dtype for x / W_ih / W_hh and the inter-layer activations
    (bf16 by default for half the HBM/VMEM traffic and native bf16 MXU rate;
    accumulation, bias and the h/c carries stay f32 inside the kernel).
  Returns output (T, B, H) and (h_n, c_n) each (num_layers, B, H) in x.dtype.
  """
  h0_all, c0_all = hidden
  T, B, _ = x.shape
  H = h0_all.shape[-1]
  Hp = _round_up(H, 128)                 # lane-aligned gate slabs / outputs
  cbytes = jnp.dtype(compute_dtype).itemsize
  sub = 8 if cbytes >= 4 else (16 if cbytes == 2 else 32)
  Bp = _round_up(B, sub)                 # sublane-dense batch rows

  # Pad the batch once; inter-layer activations stay in the padded
  # (T, Bp, Hp) layout (no per-layer slice + re-pad HBM round trips).
  x_p = x.astype(compute_dtype)
  if Bp != B:
    x_p = jnp.zeros((T, Bp, x.shape[-1]), compute_dtype).at[:, :B].set(x_p)

  # INVARIANT (correctness): every pad below is *exactly zero* — gate columns
  # H..Hp-1 of W_ih/W_hh/bias, rows H..Hp-1 of W_hh (and of W_ih for layers
  # > 0), and the padded rows/lanes of h0/c0.  With zero padding the padded
  # hidden lanes evolve as c_pad <- 0.5*c_pad, h_pad <- 0.5*tanh(0) = 0, so
  # starting from zero they stay exactly zero for every timestep and layer.
  h_n, c_n = [], []
  layer_in = x_p
  for layer, (w_ih, w_hh, bias) in enumerate(params):
    w_ih_p = _pad_gate_cols(w_ih, H, Hp)                     # (Din, 4Hp)
    if layer > 0 and Hp != H:
      # Previous layer's padded output has Hp input lanes (all-zero pads).
      w_ih_p = jnp.zeros((Hp, 4 * Hp), w_ih_p.dtype).at[:H].set(w_ih_p)
    w_hh_p = _pad_gate_cols(w_hh, H, Hp)                     # (H, 4Hp)
    if Hp != H:
      w_hh_p = jnp.zeros((Hp, 4 * Hp), w_hh_p.dtype).at[:H].set(w_hh_p)
    bias_p = _pad_gate_cols(bias, H, Hp)                     # (1, 4Hp)
    h0_p = jnp.zeros((Bp, Hp), jnp.float32).at[:B, :H].set(
        h0_all[layer].astype(jnp.float32))
    c0_p = jnp.zeros((Bp, Hp), jnp.float32).at[:B, :H].set(
        c0_all[layer].astype(jnp.float32))

    out_p, hn_p, cn_p = lstm_layer(
        layer_in, w_ih_p.astype(compute_dtype), w_hh_p.astype(compute_dtype),
        bias_p.astype(jnp.float32), h0_p, c0_p)
    h_n.append(hn_p[:B, :H])
    c_n.append(cn_p[:B, :H])
    # TODO(synk): inter-layer dropout is identity in eval mode and its result
    #             is discarded in the reference forward; not modeled.
    layer_in = out_p   # padded (T, Bp, Hp) slab feeds the next layer directly

  out = layer_in[:, :B, :H].astype(x.dtype)
  h_n = jnp.stack(h_n, 0).astype(x.dtype)
  c_n = jnp.stack(c_n, 0).astype(x.dtype)
  return out, (h_n, c_n)


def _reference_lstm(params, x, hidden):
  """Pure-JAX reference for a numerical sanity check."""
  h0_all, c0_all = hidden
  h_n, c_n = [], []
  inp = x
  for layer, (w_ih, w_hh, bias) in enumerate(params):
    h, c = h0_all[layer], c0_all[layer]
    outs = []
    H = h.shape[-1]
    for t in range(inp.shape[0]):
      g = inp[t] @ w_ih + h @ w_hh + bias
      i = jax.nn.sigmoid(g[:, 0:H])
      f = jax.nn.sigmoid(g[:, H:2 * H])
      gg = jnp.tanh(g[:, 2 * H:3 * H])
      o = jax.nn.sigmoid(g[:, 3 * H:4 * H])
      c = f * c + i * gg
      h = o * jnp.tanh(c)
      outs.append(h)
    inp = jnp.stack(outs, 0)
    h_n.append(h)
    c_n.append(c)
  return inp, (jnp.stack(h_n, 0), jnp.stack(c_n, 0))


if __name__ == "__main__":
  T, B, D, H, L = 8, 2, 16, 32, 2

  key = jax.random.PRNGKey(0)
  key, kx = jax.random.split(key)
  x = jax.random.normal(kx, (T, B, D), jnp.float32)
  params = init_lstm_params(key, D, H, L)

  # init_hidden(): zeros of shape (num_layers, B, H)
  h0 = jnp.zeros((L, B, H), jnp.float32)
  c0 = jnp.zeros((L, B, H), jnp.float32)

  ref_out, (ref_h, ref_c) = _reference_lstm(params, x, (h0, c0))

  # f32 compute path: tight tolerance vs. the pure-JAX reference.
  out32, (h32, c32) = lstm_forward(params, x, (h0, c0),
                                   compute_dtype=jnp.float32)
  jax.block_until_ready((out32, h32, c32))
  assert out32.shape == (T, B, H)
  assert h32.shape == (L, B, H) and c32.shape == (L, B, H)
  assert jnp.allclose(out32, ref_out, atol=1e-4, rtol=1e-4)
  assert jnp.allclose(h32, ref_h, atol=1e-4, rtol=1e-4)
  assert jnp.allclose(c32, ref_c, atol=1e-4, rtol=1e-4)

  # bf16 compute path (default, the performance configuration): loose tolerance.
  out16, (h16, c16) = lstm_forward(params, x, (h0, c0))
  jax.block_until_ready((out16, h16, c16))
  assert out16.shape == (T, B, H)
  assert jnp.allclose(out16, ref_out, atol=5e-2, rtol=5e-2)
  assert jnp.allclose(h16, ref_h, atol=5e-2, rtol=5e-2)
  assert jnp.allclose(c16, ref_c, atol=5e-2, rtol=5e-2)

  print("KERNEL_OK")
</pallas_src>

<mosaic_0001>
module attributes {stable_mosaic.version = 11 : i64} {
  func.func @_lstm_layer_kernel(%arg0: i32, %arg1: memref<64x16xf32, #tpu.memory_space<vmem>>, %arg2: memref<16x512xf32, #tpu.memory_space<vmem>>, %arg3: memref<128x512xf32, #tpu.memory_space<vmem>>, %arg4: memref<1x512xf32, #tpu.memory_space<vmem>>, %arg5: memref<8x128xf32, #tpu.memory_space<vmem>>, %arg6: memref<8x128xf32, #tpu.memory_space<vmem>>, %arg7: memref<8x8x128xf32, #tpu.memory_space<vmem>>, %arg8: memref<8x128xf32, #tpu.memory_space<vmem>>, %arg9: memref<8x128xf32, #tpu.memory_space<vmem>>, %arg10: memref<8x128xf32, #tpu.memory_space<vmem>>, %arg11: memref<8x128xf32, #tpu.memory_space<vmem>>, %arg12: memref<64x512xf32, #tpu.memory_space<vmem>>) attributes {dimension_semantics = [#tpu.dimension_semantics<arbitrary>], iteration_bounds = array<i64: 1>, scalar_prefetch = 0 : i64, scratch_operands = 3 : i64, tpu.core_type = #tpu.core_type<tc>, window_params = [{transform_indices = @transform_0, window_bounds = array<i64: 64, 16>}, {pipeline_mode = #tpu.pipeline_mode<synchronous>, transform_indices = @transform_1, window_bounds = array<i64: 16, 512>}, {pipeline_mode = #tpu.pipeline_mode<synchronous>, transform_indices = @transform_2, window_bounds = array<i64: 128, 512>}, {pipeline_mode = #tpu.pipeline_mode<synchronous>, transform_indices = @transform_3, window_bounds = array<i64: 1, 512>}, {pipeline_mode = #tpu.pipeline_mode<synchronous>, transform_indices = @transform_4, window_bounds = array<i64: 8, 128>}, {pipeline_mode = #tpu.pipeline_mode<synchronous>, transform_indices = @transform_5, window_bounds = array<i64: 8, 128>}, {transform_indices = @transform_6, window_bounds = array<i64: 8, 8, 128>}, {pipeline_mode = #tpu.pipeline_mode<synchronous>, transform_indices = @transform_7, window_bounds = array<i64: 8, 128>}, {pipeline_mode = #tpu.pipeline_mode<synchronous>, transform_indices = @transform_8, window_bounds = array<i64: 8, 128>}]} {
    %c0_i32 = arith.constant 0 : i32
    %0 = arith.cmpi eq, %arg0, %c0_i32 : i32
    %1 = arith.extui %0 : i1 to i32
    %c0_i32_0 = arith.constant 0 : i32
    %2 = arith.cmpi ne, %1, %c0_i32_0 : i32
    scf.if %2 {
      %c0_85 = arith.constant 0 : index
      %c0_86 = arith.constant 0 : index
      %298 = vector.load %arg5[%c0_85, %c0_86] : memref<8x128xf32, #tpu.memory_space<vmem>>, vector<8x128xf32>
      %c0_87 = arith.constant 0 : index
      %c0_88 = arith.constant 0 : index
      %299 = vector.load %arg10[%c0_87, %c0_88] : memref<8x128xf32, #tpu.memory_space<vmem>>, vector<8x128xf32>
      tpu.vector_store %arg10[%c0_87, %c0_88], %298 {strides = array<i32>} : memref<8x128xf32, #tpu.memory_space<vmem>>, vector<8x128xf32>,
      %c0_89 = arith.constant 0 : index
      %c0_90 = arith.constant 0 : index
      %300 = vector.load %arg6[%c0_89, %c0_90] : memref<8x128xf32, #tpu.memory_space<vmem>>, vector<8x128xf32>
      %c0_91 = arith.constant 0 : index
      %c0_92 = arith.constant 0 : index
      %301 = vector.load %arg11[%c0_91, %c0_92] : memref<8x128xf32, #tpu.memory_space<vmem>>, vector<8x128xf32>
      tpu.vector_store %arg11[%c0_91, %c0_92], %300 {strides = array<i32>} : memref<8x128xf32, #tpu.memory_space<vmem>>, vector<8x128xf32>,
    } else {
    }
    %c0 = arith.constant 0 : index
    %c0_1 = arith.constant 0 : index
    %3 = vector.load %arg1[%c0, %c0_1] : memref<64x16xf32, #tpu.memory_space<vmem>>, vector<64x16xf32>
    %c0_2 = arith.constant 0 : index
    %c0_3 = arith.constant 0 : index
    %4 = vector.load %arg2[%c0_2, %c0_3] : memref<16x512xf32, #tpu.memory_space<vmem>>, vector<16x512xf32>
    %cst = arith.constant dense<0.000000e+00> : vector<64x512xf32>
    %5 = tpu.matmul %3, %4, %cst {dimension_numbers = #tpu.dot_dimension_numbers<[1], [0], [0], [1], [0, 0, 1, 1], [], []>} : vector<64x16xf32>, vector<16x512xf32>, vector<64x512xf32> -> vector<64x512xf32>
    %c0_4 = arith.constant 0 : index
    %c0_5 = arith.constant 0 : index
    %6 = vector.load %arg4[%c0_4, %c0_5] : memref<1x512xf32, #tpu.memory_space<vmem>>, vector<1x512xf32>
    %7 = vector.broadcast %6 : vector<1x512xf32> to vector<64x512xf32>
    %8 = arith.addf %5, %7 : vector<64x512xf32>
    %c0_6 = arith.constant 0 : index
    %c0_7 = arith.constant 0 : index
    %9 = vector.load %arg12[%c0_6, %c0_7] : memref<64x512xf32, #tpu.memory_space<vmem>>, vector<64x512xf32>
    tpu.vector_store %arg12[%c0_6, %c0_7], %8 {strides = array<i32>} : memref<64x512xf32, #tpu.memory_space<vmem>>, vector<64x512xf32>,
    %c0_8 = arith.constant 0 : index
    %c0_9 = arith.constant 0 : index
    %10 = vector.load %arg3[%c0_8, %c0_9] : memref<128x512xf32, #tpu.memory_space<vmem>>, vector<128x512xf32>
    %c0_10 = arith.constant 0 : index
    %c0_11 = arith.constant 0 : index
    %11 = vector.load %arg10[%c0_10, %c0_11] : memref<8x128xf32, #tpu.memory_space<vmem>>, vector<8x128xf32>
    %c0_12 = arith.constant 0 : index
    %c0_13 = arith.constant 0 : index
    %12 = vector.load %arg11[%c0_12, %c0_13] : memref<8x128xf32, #tpu.memory_space<vmem>>, vector<8x128xf32>
    %c0_i32_14 = arith.constant 0 : i32
    %c8_i32 = arith.constant 8 : i32
    %13 = arith.muli %c0_i32_14, %c8_i32 : i32
    %14 = tpu.assume_multiple %13, 8 : i32
    %15 = arith.index_cast %14 : i32 to index
    %c0_15 = arith.constant 0 : index
    %16 = vector.load %arg12[%15, %c0_15] : memref<64x512xf32, #tpu.memory_space<vmem>>, vector<8x512xf32>
    %cst_16 = arith.constant dense<0.000000e+00> : vector<8x512xf32>
    %17 = tpu.matmul %11, %10, %cst_16 {dimension_numbers = #tpu.dot_dimension_numbers<[1], [0], [0], [1], [0, 0, 1, 1], [], []>} : vector<8x128xf32>, vector<128x512xf32>, vector<8x512xf32> -> vector<8x512xf32>
    %18 = arith.addf %16, %17 : vector<8x512xf32>
    %19 = vector.extract_strided_slice %18 {offsets = [0, 0], sizes = [8, 128], strides = [1, 1]} : vector<8x512xf32> to vector<8x128xf32>
    %20 = arith.negf %19 : vector<8x128xf32>
    %21 = math.exp %20 : vector<8x128xf32>
    %cst_17 = arith.constant 1.000000e+00 : f32
    %22 = vector.broadcast %cst_17 : f32 to vector<8x128xf32>
    %23 = arith.addf %22, %21 : vector<8x128xf32>
    %24 = arith.divf %22, %23 : vector<8x128xf32>
    %25 = vector.extract_strided_slice %18 {offsets = [0, 128], sizes = [8, 128], strides = [1, 1]} : vector<8x512xf32> to vector<8x128xf32>
    %26 = arith.negf %25 : vector<8x128xf32>
    %27 = math.exp %26 : vector<8x128xf32>
    %cst_18 = arith.constant 1.000000e+00 : f32
    %28 = vector.broadcast %cst_18 : f32 to vector<8x128xf32>
    %29 = arith.addf %28, %27 : vector<8x128xf32>
    %30 = arith.divf %28, %29 : vector<8x128xf32>
    %31 = vector.extract_strided_slice %18 {offsets = [0, 256], sizes = [8, 128], strides = [1, 1]} : vector<8x512xf32> to vector<8x128xf32>
    %32 = math.tanh %31 : vector<8x128xf32>
    %33 = vector.extract_strided_slice %18 {offsets = [0, 384], sizes = [8, 128], strides = [1, 1]} : vector<8x512xf32> to vector<8x128xf32>
    %34 = arith.negf %33 : vector<8x128xf32>
    %35 = math.exp %34 : vector<8x128xf32>
    %cst_19 = arith.constant 1.000000e+00 : f32
    %36 = vector.broadcast %cst_19 : f32 to vector<8x128xf32>
    %37 = arith.addf %36, %35 : vector<8x128xf32>
    %38 = arith.divf %36, %37 : vector<8x128xf32>
    %39 = arith.mulf %30, %12 : vector<8x128xf32>
    %40 = arith.mulf %24, %32 : vector<8x128xf32>
    %41 = arith.addf %39, %40 : vector<8x128xf32>
    %42 = math.tanh %41 : vector<8x128xf32>
    %43 = arith.mulf %38, %42 : vector<8x128xf32>
    %44 = arith.index_cast %c0_i32_14 : i32 to index
    %c0_20 = arith.constant 0 : index
    %c0_21 = arith.constant 0 : index
    %45 = vector.load %arg7[%44, %c0_20, %c0_21] : memref<8x8x128xf32, #tpu.memory_space<vmem>>, vector<1x8x128xf32>
    %46 = vector.shape_cast %45 : vector<1x8x128xf32> to vector<8x128xf32>
    %47 = vector.shape_cast %43 : vector<8x128xf32> to vector<1x8x128xf32>
    tpu.vector_store %arg7[%44, %c0_20, %c0_21], %47 {strides = array<i32>} : memref<8x8x128xf32, #tpu.memory_space<vmem>>, vector<1x8x128xf32>,
    %c1_i32 = arith.constant 1 : i32
    %c8_i32_22 = arith.constant 8 : i32
    %48 = arith.muli %c1_i32, %c8_i32_22 : i32
    %49 = tpu.assume_multiple %48, 8 : i32
    %50 = arith.index_cast %49 : i32 to index
    %c0_23 = arith.constant 0 : index
    %51 = vector.load %arg12[%50, %c0_23] : memref<64x512xf32, #tpu.memory_space<vmem>>, vector<8x512xf32>
    %cst_24 = arith.constant dense<0.000000e+00> : vector<8x512xf32>
    %52 = tpu.matmul %43, %10, %cst_24 {dimension_numbers = #tpu.dot_dimension_numbers<[1], [0], [0], [1], [0, 0, 1, 1], [], []>} : vector<8x128xf32>, vector<128x512xf32>, vector<8x512xf32> -> vector<8x512xf32>
    %53 = arith.addf %51, %52 : vector<8x512xf32>
    %54 = vector.extract_strided_slice %53 {offsets = [0, 0], sizes = [8, 128], strides = [1, 1]} : vector<8x512xf32> to vector<8x128xf32>
    %55 = arith.negf %54 : vector<8x128xf32>
    %56 = math.exp %55 : vector<8x128xf32>
    %cst_25 = arith.constant 1.000000e+00 : f32
    %57 = vector.broadcast %cst_25 : f32 to vector<8x128xf32>
    %58 = arith.addf %57, %56 : vector<8x128xf32>
    %59 = arith.divf %57, %58 : vector<8x128xf32>
    %60 = vector.extract_strided_slice %53 {offsets = [0, 128], sizes = [8, 128], strides = [1, 1]} : vector<8x512xf32> to vector<8x128xf32>
    %61 = arith.negf %60 : vector<8x128xf32>
    %62 = math.exp %61 : vector<8x128xf32>
    %cst_26 = arith.constant 1.000000e+00 : f32
    %63 = vector.broadcast %cst_26 : f32 to vector<8x128xf32>
    %64 = arith.addf %63, %62 : vector<8x128xf32>
    %65 = arith.divf %63, %64 : vector<8x128xf32>
    %66 = vector.extract_strided_slice %53 {offsets = [0, 256], sizes = [8, 128], strides = [1, 1]} : vector<8x512xf32> to vector<8x128xf32>
    %67 = math.tanh %66 : vector<8x128xf32>
    %68 = vector.extract_strided_slice %53 {offsets = [0, 384], sizes = [8, 128], strides = [1, 1]} : vector<8x512xf32> to vector<8x128xf32>
    %69 = arith.negf %68 : vector<8x128xf32>
    %70 = math.exp %69 : vector<8x128xf32>
    %cst_27 = arith.constant 1.000000e+00 : f32
    %71 = vector.broadcast %cst_27 : f32 to vector<8x128xf32>
    %72 = arith.addf %71, %70 : vector<8x128xf32>
    %73 = arith.divf %71, %72 : vector<8x128xf32>
    %74 = arith.mulf %65, %41 : vector<8x128xf32>
    %75 = arith.mulf %59, %67 : vector<8x128xf32>
    %76 = arith.addf %74, %75 : vector<8x128xf32>
    %77 = math.tanh %76 : vector<8x128xf32>
    %78 = arith.mulf %73, %77 : vector<8x128xf32>
    %79 = arith.index_cast %c1_i32 : i32 to index
    %c0_28 = arith.constant 0 : index
    %c0_29 = arith.constant 0 : index
    %80 = vector.load %arg7[%79, %c0_28, %c0_29] : memref<8x8x128xf32, #tpu.memory_space<vmem>>, vector<1x8x128xf32>
    %81 = vector.shape_cast %80 : vector<1x8x128xf32> to vector<8x128xf32>
    %82 = vector.shape_cast %78 : vector<8x128xf32> to vector<1x8x128xf32>
    tpu.vector_store %arg7[%79, %c0_28, %c0_29], %82 {strides = array<i32>} : memref<8x8x128xf32, #tpu.memory_space<vmem>>, vector<1x8x128xf32>,
    %c2_i32 = arith.constant 2 : i32
    %c8_i32_30 = arith.constant 8 : i32
    %83 = arith.muli %c2_i32, %c8_i32_30 : i32
    %84 = tpu.assume_multiple %83, 8 : i32
    %85 = arith.index_cast %84 : i32 to index
    %c0_31 = arith.constant 0 : index
    %86 = vector.load %arg12[%85, %c0_31] : memref<64x512xf32, #tpu.memory_space<vmem>>, vector<8x512xf32>
    %cst_32 = arith.constant dense<0.000000e+00> : vector<8x512xf32>
    %87 = tpu.matmul %78, %10, %cst_32 {dimension_numbers = #tpu.dot_dimension_numbers<[1], [0], [0], [1], [0, 0, 1, 1], [], []>} : vector<8x128xf32>, vector<128x512xf32>, vector<8x512xf32> -> vector<8x512xf32>
    %88 = arith.addf %86, %87 : vector<8x512xf32>
    %89 = vector.extract_strided_slice %88 {offsets = [0, 0], sizes = [8, 128], strides = [1, 1]} : vector<8x512xf32> to vector<8x128xf32>
    %90 = arith.negf %89 : vector<8x128xf32>
    %91 = math.exp %90 : vector<8x128xf32>
    %cst_33 = arith.constant 1.000000e+00 : f32
    %92 = vector.broadcast %cst_33 : f32 to vector<8x128xf32>
    %93 = arith.addf %92, %91 : vector<8x128xf32>
    %94 = arith.divf %92, %93 : vector<8x128xf32>
    %95 = vector.extract_strided_slice %88 {offsets = [0, 128], sizes = [8, 128], strides = [1, 1]} : vector<8x512xf32> to vector<8x128xf32>
    %96 = arith.negf %95 : vector<8x128xf32>
    %97 = math.exp %96 : vector<8x128xf32>
    %cst_34 = arith.constant 1.000000e+00 : f32
    %98 = vector.broadcast %cst_34 : f32 to vector<8x128xf32>
    %99 = arith.addf %98, %97 : vector<8x128xf32>
    %100 = arith.divf %98, %99 : vector<8x128xf32>
    %101 = vector.extract_strided_slice %88 {offsets = [0, 256], sizes = [8, 128], strides = [1, 1]} : vector<8x512xf32> to vector<8x128xf32>
    %102 = math.tanh %101 : vector<8x128xf32>
    %103 = vector.extract_strided_slice %88 {offsets = [0, 384], sizes = [8, 128], strides = [1, 1]} : vector<8x512xf32> to vector<8x128xf32>
    %104 = arith.negf %103 : vector<8x128xf32>
    %105 = math.exp %104 : vector<8x128xf32>
    %cst_35 = arith.constant 1.000000e+00 : f32
    %106 = vector.broadcast %cst_35 : f32 to vector<8x128xf32>
    %107 = arith.addf %106, %105 : vector<8x128xf32>
    %108 = arith.divf %106, %107 : vector<8x128xf32>
    %109 = arith.mulf %100, %76 : vector<8x128xf32>
    %110 = arith.mulf %94, %102 : vector<8x128xf32>
    %111 = arith.addf %109, %110 : vector<8x128xf32>
    %112 = math.tanh %111 : vector<8x128xf32>
    %113 = arith.mulf %108, %112 : vector<8x128xf32>
    %114 = arith.index_cast %c2_i32 : i32 to index
    %c0_36 = arith.constant 0 : index
    %c0_37 = arith.constant 0 : index
    %115 = vector.load %arg7[%114, %c0_36, %c0_37] : memref<8x8x128xf32, #tpu.memory_space<vmem>>, vector<1x8x128xf32>
    %116 = vector.shape_cast %115 : vector<1x8x128xf32> to vector<8x128xf32>
    %117 = vector.shape_cast %113 : vector<8x128xf32> to vector<1x8x128xf32>
    tpu.vector_store %arg7[%114, %c0_36, %c0_37], %117 {strides = array<i32>} : memref<8x8x128xf32, #tpu.memory_space<vmem>>, vector<1x8x128xf32>,
    %c3_i32 = arith.constant 3 : i32
    %c8_i32_38 = arith.constant 8 : i32
    %118 = arith.muli %c3_i32, %c8_i32_38 : i32
    %119 = tpu.assume_multiple %118, 8 : i32
    %120 = arith.index_cast %119 : i32 to index
    %c0_39 = arith.constant 0 : index
    %121 = vector.load %arg12[%120, %c0_39] : memref<64x512xf32, #tpu.memory_space<vmem>>, vector<8x512xf32>
    %cst_40 = arith.constant dense<0.000000e+00> : vector<8x512xf32>
    %122 = tpu.matmul %113, %10, %cst_40 {dimension_numbers = #tpu.dot_dimension_numbers<[1], [0], [0], [1], [0, 0, 1, 1], [], []>} : vector<8x128xf32>, vector<128x512xf32>, vector<8x512xf32> -> vector<8x512xf32>
    %123 = arith.addf %121, %122 : vector<8x512xf32>
    %124 = vector.extract_strided_slice %123 {offsets = [0, 0], sizes = [8, 128], strides = [1, 1]} : vector<8x512xf32> to vector<8x128xf32>
    %125 = arith.negf %124 : vector<8x128xf32>
    %126 = math.exp %125 : vector<8x128xf32>
    %cst_41 = arith.constant 1.000000e+00 : f32
    %127 = vector.broadcast %cst_41 : f32 to vector<8x128xf32>
    %128 = arith.addf %127, %126 : vector<8x128xf32>
    %129 = arith.divf %127, %128 : vector<8x128xf32>
    %130 = vector.extract_strided_slice %123 {offsets = [0, 128], sizes = [8, 128], strides = [1, 1]} : vector<8x512xf32> to vector<8x128xf32>
    %131 = arith.negf %130 : vector<8x128xf32>
    %132 = math.exp %131 : vector<8x128xf32>
    %cst_42 = arith.constant 1.000000e+00 : f32
    %133 = vector.broadcast %cst_42 : f32 to vector<8x128xf32>
    %134 = arith.addf %133, %132 : vector<8x128xf32>
    %135 = arith.divf %133, %134 : vector<8x128xf32>
    %136 = vector.extract_strided_slice %123 {offsets = [0, 256], sizes = [8, 128], strides = [1, 1]} : vector<8x512xf32> to vector<8x128xf32>
    %137 = math.tanh %136 : vector<8x128xf32>
    %138 = vector.extract_strided_slice %123 {offsets = [0, 384], sizes = [8, 128], strides = [1, 1]} : vector<8x512xf32> to vector<8x128xf32>
    %139 = arith.negf %138 : vector<8x128xf32>
    %140 = math.exp %139 : vector<8x128xf32>
    %cst_43 = arith.constant 1.000000e+00 : f32
    %141 = vector.broadcast %cst_43 : f32 to vector<8x128xf32>
    %142 = arith.addf %141, %140 : vector<8x128xf32>
    %143 = arith.divf %141, %142 : vector<8x128xf32>
    %144 = arith.mulf %135, %111 : vector<8x128xf32>
    %145 = arith.mulf %129, %137 : vector<8x128xf32>
    %146 = arith.addf %144, %145 : vector<8x128xf32>
    %147 = math.tanh %146 : vector<8x128xf32>
    %148 = arith.mulf %143, %147 : vector<8x128xf32>
    %149 = arith.index_cast %c3_i32 : i32 to index
    %c0_44 = arith.constant 0 : index
    %c0_45 = arith.constant 0 : index
    %150 = vector.load %arg7[%149, %c0_44, %c0_45] : memref<8x8x128xf32, #tpu.memory_space<vmem>>, vector<1x8x128xf32>
    %151 = vector.shape_cast %150 : vector<1x8x128xf32> to vector<8x128xf32>
    %152 = vector.shape_cast %148 : vector<8x128xf32> to vector<1x8x128xf32>
    tpu.vector_store %arg7[%149, %c0_44, %c0_45], %152 {strides = array<i32>} : memref<8x8x128xf32, #tpu.memory_space<vmem>>, vector<1x8x128xf32>,
    %c4_i32 = arith.constant 4 : i32
    %c8_i32_46 = arith.constant 8 : i32
    %153 = arith.muli %c4_i32, %c8_i32_46 : i32
    %154 = tpu.assume_multiple %153, 8 : i32
    %155 = arith.index_cast %154 : i32 to index
    %c0_47 = arith.constant 0 : index
    %156 = vector.load %arg12[%155, %c0_47] : memref<64x512xf32, #tpu.memory_space<vmem>>, vector<8x512xf32>
    %cst_48 = arith.constant dense<0.000000e+00> : vector<8x512xf32>
    %157 = tpu.matmul %148, %10, %cst_48 {dimension_numbers = #tpu.dot_dimension_numbers<[1], [0], [0], [1], [0, 0, 1, 1], [], []>} : vector<8x128xf32>, vector<128x512xf32>, vector<8x512xf32> -> vector<8x512xf32>
    %158 = arith.addf %156, %157 : vector<8x512xf32>
    %159 = vector.extract_strided_slice %158 {offsets = [0, 0], sizes = [8, 128], strides = [1, 1]} : vector<8x512xf32> to vector<8x128xf32>
    %160 = arith.negf %159 : vector<8x128xf32>
    %161 = math.exp %160 : vector<8x128xf32>
    %cst_49 = arith.constant 1.000000e+00 : f32
    %162 = vector.broadcast %cst_49 : f32 to vector<8x128xf32>
    %163 = arith.addf %162, %161 : vector<8x128xf32>
    %164 = arith.divf %162, %163 : vector<8x128xf32>
    %165 = vector.extract_strided_slice %158 {offsets = [0, 128], sizes = [8, 128], strides = [1, 1]} : vector<8x512xf32> to vector<8x128xf32>
    %166 = arith.negf %165 : vector<8x128xf32>
    %167 = math.exp %166 : vector<8x128xf32>
    %cst_50 = arith.constant 1.000000e+00 : f32
    %168 = vector.broadcast %cst_50 : f32 to vector<8x128xf32>
    %169 = arith.addf %168, %167 : vector<8x128xf32>
    %170 = arith.divf %168, %169 : vector<8x128xf32>
    %171 = vector.extract_strided_slice %158 {offsets = [0, 256], sizes = [8, 128], strides = [1, 1]} : vector<8x512xf32> to vector<8x128xf32>
    %172 = math.tanh %171 : vector<8x128xf32>
    %173 = vector.extract_strided_slice %158 {offsets = [0, 384], sizes = [8, 128], strides = [1, 1]} : vector<8x512xf32> to vector<8x128xf32>
    %174 = arith.negf %173 : vector<8x128xf32>
    %175 = math.exp %174 : vector<8x128xf32>
    %cst_51 = arith.constant 1.000000e+00 : f32
    %176 = vector.broadcast %cst_51 : f32 to vector<8x128xf32>
    %177 = arith.addf %176, %175 : vector<8x128xf32>
    %178 = arith.divf %176, %177 : vector<8x128xf32>
    %179 = arith.mulf %170, %146 : vector<8x128xf32>
    %180 = arith.mulf %164, %172 : vector<8x128xf32>
    %181 = arith.addf %179, %180 : vector<8x128xf32>
    %182 = math.tanh %181 : vector<8x128xf32>
    %183 = arith.mulf %178, %182 : vector<8x128xf32>
    %184 = arith.index_cast %c4_i32 : i32 to index
    %c0_52 = arith.constant 0 : index
    %c0_53 = arith.constant 0 : index
    %185 = vector.load %arg7[%184, %c0_52, %c0_53] : memref<8x8x128xf32, #tpu.memory_space<vmem>>, vector<1x8x128xf32>
    %186 = vector.shape_cast %185 : vector<1x8x128xf32> to vector<8x128xf32>
    %187 = vector.shape_cast %183 : vector<8x128xf32> to vector<1x8x128xf32>
    tpu.vector_store %arg7[%184, %c0_52, %c0_53], %187 {strides = array<i32>} : memref<8x8x128xf32, #tpu.memory_space<vmem>>, vector<1x8x128xf32>,
    %c5_i32 = arith.constant 5 : i32
    %c8_i32_54 = arith.constant 8 : i32
    %188 = arith.muli %c5_i32, %c8_i32_54 : i32
    %189 = tpu.assume_multiple %188, 8 : i32
    %190 = arith.index_cast %189 : i32 to index
    %c0_55 = arith.constant 0 : index
    %191 = vector.load %arg12[%190, %c0_55] : memref<64x512xf32, #tpu.memory_space<vmem>>, vector<8x512xf32>
    %cst_56 = arith.constant dense<0.000000e+00> : vector<8x512xf32>
    %192 = tpu.matmul %183, %10, %cst_56 {dimension_numbers = #tpu.dot_dimension_numbers<[1], [0], [0], [1], [0, 0, 1, 1], [], []>} : vector<8x128xf32>, vector<128x512xf32>, vector<8x512xf32> -> vector<8x512xf32>
    %193 = arith.addf %191, %192 : vector<8x512xf32>
    %194 = vector.extract_strided_slice %193 {offsets = [0, 0], sizes = [8, 128], strides = [1, 1]} : vector<8x512xf32> to vector<8x128xf32>
    %195 = arith.negf %194 : vector<8x128xf32>
    %196 = math.exp %195 : vector<8x128xf32>
    %cst_57 = arith.constant 1.000000e+00 : f32
    %197 = vector.broadcast %cst_57 : f32 to vector<8x128xf32>
    %198 = arith.addf %197, %196 : vector<8x128xf32>
    %199 = arith.divf %197, %198 : vector<8x128xf32>
    %200 = vector.extract_strided_slice %193 {offsets = [0, 128], sizes = [8, 128], strides = [1, 1]} : vector<8x512xf32> to vector<8x128xf32>
    %201 = arith.negf %200 : vector<8x128xf32>
    %202 = math.exp %201 : vector<8x128xf32>
    %cst_58 = arith.constant 1.000000e+00 : f32
    %203 = vector.broadcast %cst_58 : f32 to vector<8x128xf32>
    %204 = arith.addf %203, %202 : vector<8x128xf32>
    %205 = arith.divf %203, %204 : vector<8x128xf32>
    %206 = vector.extract_strided_slice %193 {offsets = [0, 256], sizes = [8, 128], strides = [1, 1]} : vector<8x512xf32> to vector<8x128xf32>
    %207 = math.tanh %206 : vector<8x128xf32>
    %208 = vector.extract_strided_slice %193 {offsets = [0, 384], sizes = [8, 128], strides = [1, 1]} : vector<8x512xf32> to vector<8x128xf32>
    %209 = arith.negf %208 : vector<8x128xf32>
    %210 = math.exp %209 : vector<8x128xf32>
    %cst_59 = arith.constant 1.000000e+00 : f32
    %211 = vector.broadcast %cst_59 : f32 to vector<8x128xf32>
    %212 = arith.addf %211, %210 : vector<8x128xf32>
    %213 = arith.divf %211, %212 : vector<8x128xf32>
    %214 = arith.mulf %205, %181 : vector<8x128xf32>
    %215 = arith.mulf %199, %207 : vector<8x128xf32>
    %216 = arith.addf %214, %215 : vector<8x128xf32>
    %217 = math.tanh %216 : vector<8x128xf32>
    %218 = arith.mulf %213, %217 : vector<8x128xf32>
    %219 = arith.index_cast %c5_i32 : i32 to index
    %c0_60 = arith.constant 0 : index
    %c0_61 = arith.constant 0 : index
    %220 = vector.load %arg7[%219, %c0_60, %c0_61] : memref<8x8x128xf32, #tpu.memory_space<vmem>>, vector<1x8x128xf32>
    %221 = vector.shape_cast %220 : vector<1x8x128xf32> to vector<8x128xf32>
    %222 = vector.shape_cast %218 : vector<8x128xf32> to vector<1x8x128xf32>
    tpu.vector_store %arg7[%219, %c0_60, %c0_61], %222 {strides = array<i32>} : memref<8x8x128xf32, #tpu.memory_space<vmem>>, vector<1x8x128xf32>,
    %c6_i32 = arith.constant 6 : i32
    %c8_i32_62 = arith.constant 8 : i32
    %223 = arith.muli %c6_i32, %c8_i32_62 : i32
    %224 = tpu.assume_multiple %223, 8 : i32
    %225 = arith.index_cast %224 : i32 to index
    %c0_63 = arith.constant 0 : index
    %226 = vector.load %arg12[%225, %c0_63] : memref<64x512xf32, #tpu.memory_space<vmem>>, vector<8x512xf32>
    %cst_64 = arith.constant dense<0.000000e+00> : vector<8x512xf32>
    %227 = tpu.matmul %218, %10, %cst_64 {dimension_numbers = #tpu.dot_dimension_numbers<[1], [0], [0], [1], [0, 0, 1, 1], [], []>} : vector<8x128xf32>, vector<128x512xf32>, vector<8x512xf32> -> vector<8x512xf32>
    %228 = arith.addf %226, %227 : vector<8x512xf32>
    %229 = vector.extract_strided_slice %228 {offsets = [0, 0], sizes = [8, 128], strides = [1, 1]} : vector<8x512xf32> to vector<8x128xf32>
    %230 = arith.negf %229 : vector<8x128xf32>
    %231 = math.exp %230 : vector<8x128xf32>
    %cst_65 = arith.constant 1.000000e+00 : f32
    %232 = vector.broadcast %cst_65 : f32 to vector<8x128xf32>
    %233 = arith.addf %232, %231 : vector<8x128xf32>
    %234 = arith.divf %232, %233 : vector<8x128xf32>
    %235 = vector.extract_strided_slice %228 {offsets = [0, 128], sizes = [8, 128], strides = [1, 1]} : vector<8x512xf32> to vector<8x128xf32>
    %236 = arith.negf %235 : vector<8x128xf32>
    %237 = math.exp %236 : vector<8x128xf32>
    %cst_66 = arith.constant 1.000000e+00 : f32
    %238 = vector.broadcast %cst_66 : f32 to vector<8x128xf32>
    %239 = arith.addf %238, %237 : vector<8x128xf32>
    %240 = arith.divf %238, %239 : vector<8x128xf32>
    %241 = vector.extract_strided_slice %228 {offsets = [0, 256], sizes = [8, 128], strides = [1, 1]} : vector<8x512xf32> to vector<8x128xf32>
    %242 = math.tanh %241 : vector<8x128xf32>
    %243 = vector.extract_strided_slice %228 {offsets = [0, 384], sizes = [8, 128], strides = [1, 1]} : vector<8x512xf32> to vector<8x128xf32>
    %244 = arith.negf %243 : vector<8x128xf32>
    %245 = math.exp %244 : vector<8x128xf32>
    %cst_67 = arith.constant 1.000000e+00 : f32
    %246 = vector.broadcast %cst_67 : f32 to vector<8x128xf32>
    %247 = arith.addf %246, %245 : vector<8x128xf32>
    %248 = arith.divf %246, %247 : vector<8x128xf32>
    %249 = arith.mulf %240, %216 : vector<8x128xf32>
    %250 = arith.mulf %234, %242 : vector<8x128xf32>
    %251 = arith.addf %249, %250 : vector<8x128xf32>
    %252 = math.tanh %251 : vector<8x128xf32>
    %253 = arith.mulf %248, %252 : vector<8x128xf32>
    %254 = arith.index_cast %c6_i32 : i32 to index
    %c0_68 = arith.constant 0 : index
    %c0_69 = arith.constant 0 : index
    %255 = vector.load %arg7[%254, %c0_68, %c0_69] : memref<8x8x128xf32, #tpu.memory_space<vmem>>, vector<1x8x128xf32>
    %256 = vector.shape_cast %255 : vector<1x8x128xf32> to vector<8x128xf32>
    %257 = vector.shape_cast %253 : vector<8x128xf32> to vector<1x8x128xf32>
    tpu.vector_store %arg7[%254, %c0_68, %c0_69], %257 {strides = array<i32>} : memref<8x8x128xf32, #tpu.memory_space<vmem>>, vector<1x8x128xf32>,
    %c7_i32 = arith.constant 7 : i32
    %c8_i32_70 = arith.constant 8 : i32
    %258 = arith.muli %c7_i32, %c8_i32_70 : i32
    %259 = tpu.assume_multiple %258, 8 : i32
    %260 = arith.index_cast %259 : i32 to index
    %c0_71 = arith.constant 0 : index
    %261 = vector.load %arg12[%260, %c0_71] : memref<64x512xf32, #tpu.memory_space<vmem>>, vector<8x512xf32>
    %cst_72 = arith.constant dense<0.000000e+00> : vector<8x512xf32>
    %262 = tpu.matmul %253, %10, %cst_72 {dimension_numbers = #tpu.dot_dimension_numbers<[1], [0], [0], [1], [0, 0, 1, 1], [], []>} : vector<8x128xf32>, vector<128x512xf32>, vector<8x512xf32> -> vector<8x512xf32>
    %263 = arith.addf %261, %262 : vector<8x512xf32>
    %264 = vector.extract_strided_slice %263 {offsets = [0, 0], sizes = [8, 128], strides = [1, 1]} : vector<8x512xf32> to vector<8x128xf32>
    %265 = arith.negf %264 : vector<8x128xf32>
    %266 = math.exp %265 : vector<8x128xf32>
    %cst_73 = arith.constant 1.000000e+00 : f32
    %267 = vector.broadcast %cst_73 : f32 to vector<8x128xf32>
    %268 = arith.addf %267, %266 : vector<8x128xf32>
    %269 = arith.divf %267, %268 : vector<8x128xf32>
    %270 = vector.extract_strided_slice %263 {offsets = [0, 128], sizes = [8, 128], strides = [1, 1]} : vector<8x512xf32> to vector<8x128xf32>
    %271 = arith.negf %270 : vector<8x128xf32>
    %272 = math.exp %271 : vector<8x128xf32>
    %cst_74 = arith.constant 1.000000e+00 : f32
    %273 = vector.broadcast %cst_74 : f32 to vector<8x128xf32>
    %274 = arith.addf %273, %272 : vector<8x128xf32>
    %275 = arith.divf %273, %274 : vector<8x128xf32>
    %276 = vector.extract_strided_slice %263 {offsets = [0, 256], sizes = [8, 128], strides = [1, 1]} : vector<8x512xf32> to vector<8x128xf32>
    %277 = math.tanh %276 : vector<8x128xf32>
    %278 = vector.extract_strided_slice %263 {offsets = [0, 384], sizes = [8, 128], strides = [1, 1]} : vector<8x512xf32> to vector<8x128xf32>
    %279 = arith.negf %278 : vector<8x128xf32>
    %280 = math.exp %279 : vector<8x128xf32>
    %cst_75 = arith.constant 1.000000e+00 : f32
    %281 = vector.broadcast %cst_75 : f32 to vector<8x128xf32>
    %282 = arith.addf %281, %280 : vector<8x128xf32>
    %283 = arith.divf %281, %282 : vector<8x128xf32>
    %284 = arith.mulf %275, %251 : vector<8x128xf32>
    %285 = arith.mulf %269, %277 : vector<8x128xf32>
    %286 = arith.addf %284, %285 : vector<8x128xf32>
    %287 = math.tanh %286 : vector<8x128xf32>
    %288 = arith.mulf %283, %287 : vector<8x128xf32>
    %289 = arith.index_cast %c7_i32 : i32 to index
    %c0_76 = arith.constant 0 : index
    %c0_77 = arith.constant 0 : index
    %290 = vector.load %arg7[%289, %c0_76, %c0_77] : memref<8x8x128xf32, #tpu.memory_space<vmem>>, vector<1x8x128xf32>
    %291 = vector.shape_cast %290 : vector<1x8x128xf32> to vector<8x128xf32>
    %292 = vector.shape_cast %288 : vector<8x128xf32> to vector<1x8x128xf32>
    tpu.vector_store %arg7[%289, %c0_76, %c0_77], %292 {strides = array<i32>} : memref<8x8x128xf32, #tpu.memory_space<vmem>>, vector<1x8x128xf32>,
    %c8_i32_78 = arith.constant 8 : i32
    %c0_79 = arith.constant 0 : index
    %c0_80 = arith.constant 0 : index
    %293 = vector.load %arg10[%c0_79, %c0_80] : memref<8x128xf32, #tpu.memory_space<vmem>>, vector<8x128xf32>
    tpu.vector_store %arg10[%c0_79, %c0_80], %288 {strides = array<i32>} : memref<8x128xf32, #tpu.memory_space<vmem>>, vector<8x128xf32>,
    %c0_81 = arith.constant 0 : index
    %c0_82 = arith.constant 0 : index
    %294 = vector.load %arg11[%c0_81, %c0_82] : memref<8x128xf32, #tpu.memory_space<vmem>>, vector<8x128xf32>
    tpu.vector_store %arg11[%c0_81, %c0_82], %286 {strides = array<i32>} : memref<8x128xf32, #tpu.memory_space<vmem>>, vector<8x128xf32>,
    %c0_i32_83 = arith.constant 0 : i32
    %295 = arith.cmpi eq, %arg0, %c0_i32_83 : i32
    %296 = arith.extui %295 : i1 to i32
    %c0_i32_84 = arith.constant 0 : i32
    %297 = arith.cmpi ne, %296, %c0_i32_84 : i32
    scf.if %297 {
      %c0_85 = arith.constant 0 : index
      %c0_86 = arith.constant 0 : index
      %298 = vector.load %arg8[%c0_85, %c0_86] : memref<8x128xf32, #tpu.memory_space<vmem>>, vector<8x128xf32>
      tpu.vector_store %arg8[%c0_85, %c0_86], %288 {strides = array<i32>} : memref<8x128xf32, #tpu.memory_space<vmem>>, vector<8x128xf32>,
      %c0_87 = arith.constant 0 : index
      %c0_88 = arith.constant 0 : index
      %299 = vector.load %arg9[%c0_87, %c0_88] : memref<8x128xf32, #tpu.memory_space<vmem>>, vector<8x128xf32>
      tpu.vector_store %arg9[%c0_87, %c0_88], %286 {strides = array<i32>} : memref<8x128xf32, #tpu.memory_space<vmem>>, vector<8x128xf32>,
    } else {
    }
    return
  }
  func.func @transform_0(%arg0: i32) -> (i32, i32) {
    %c0_i32 = arith.constant 0 : i32
    %c0_i32_0 = arith.constant 0 : i32
    return %arg0, %c0_i32 : i32, i32
  }
  func.func @transform_1(%arg0: i32) -> (i32, i32) {
    %c0_i32 = arith.constant 0 : i32
    %c0_i32_0 = arith.constant 0 : i32
    %c0_i32_1 = arith.constant 0 : i32
    return %c0_i32, %c0_i32_0 : i32, i32
  }
  func.func @transform_2(%arg0: i32) -> (i32, i32) {
    %c0_i32 = arith.constant 0 : i32
    %c0_i32_0 = arith.constant 0 : i32
    %c0_i32_1 = arith.constant 0 : i32
    return %c0_i32, %c0_i32_0 : i32, i32
  }
  func.func @transform_3(%arg0: i32) -> (i32, i32) {
    %c0_i32 = arith.constant 0 : i32
    %c0_i32_0 = arith.constant 0 : i32
    %c0_i32_1 = arith.constant 0 : i32
    return %c0_i32, %c0_i32_0 : i32, i32
  }
  func.func @transform_4(%arg0: i32) -> (i32, i32) {
    %c0_i32 = arith.constant 0 : i32
    %c0_i32_0 = arith.constant 0 : i32
    %c0_i32_1 = arith.constant 0 : i32
    return %c0_i32, %c0_i32_0 : i32, i32
  }
  func.func @transform_5(%arg0: i32) -> (i32, i32) {
    %c0_i32 = arith.constant 0 : i32
    %c0_i32_0 = arith.constant 0 : i32
    %c0_i32_1 = arith.constant 0 : i32
    return %c0_i32, %c0_i32_0 : i32, i32
  }
  func.func @transform_6(%arg0: i32) -> (i32, i32, i32) {
    %c0_i32 = arith.constant 0 : i32
    %c0_i32_0 = arith.constant 0 : i32
    %c0_i32_1 = arith.constant 0 : i32
    return %arg0, %c0_i32, %c0_i32_0 : i32, i32, i32
  }
  func.func @transform_7(%arg0: i32) -> (i32, i32) {
    %c0_i32 = arith.constant 0 : i32
    %c0_i32_0 = arith.constant 0 : i32
    %c0_i32_1 = arith.constant 0 : i32
    return %c0_i32, %c0_i32_0 : i32, i32
  }
  func.func @transform_8(%arg0: i32) -> (i32, i32) {
    %c0_i32 = arith.constant 0 : i32
    %c0_i32_0 = arith.constant 0 : i32
    %c0_i32_1 = arith.constant 0 : i32
    return %c0_i32, %c0_i32_0 : i32, i32
  }
}

</mosaic_0001>

<llo_original>
// kernel: tpu_custom_call.1
$region0: #{tpu_custom_call.1}
  #allocation0 [shape = 'u32[]', space=smem, size = 0x4, offset = 0x4, fixed_abs, tag = 'smem constant byte address 0x4 - core index']
  #allocation1 [shape = 'u32[144,128]{1,0:T(1,128)}', space=vmem, size = 0x12000, scoped, tag = 'internal scratch']
  #allocation2 [shape = 'f32[8,128]{1,0:T(8,128)}', space=vmem, size = 0x1000, scoped, tag = 'scratch operand']
  #allocation3 [shape = 'f32[8,128]{1,0:T(8,128)}', space=vmem, size = 0x1000, scoped, tag = 'scratch operand']
  #allocation4 [shape = 'f32[64,512]{1,0:T(8,128)}', space=vmem, size = 0x20000, scoped, tag = 'scratch operand']
  %s0 = inlined_call_operand.vmem [shape: f32[64,16], index: 0, kind: input, shape index: {}]
  %s1 = inlined_call_operand.vmem [shape: f32[16,512], index: 1, kind: input, shape index: {}]
  %s2 = inlined_call_operand.hbm [shape: f32[128,512], index: 2, kind: input, shape index: {}]
  %s3 = inlined_call_operand.vmem [shape: f32[1,512], index: 3, kind: input, shape index: {}]
  %s4 = inlined_call_operand.vmem [shape: f32[8,128], index: 4, kind: input, shape index: {}]
  %s5 = inlined_call_operand.vmem [shape: f32[8,128], index: 5, kind: input, shape index: {}]
  %s6 = inlined_call_operand.hbm [shape: f32[8,8,128], index: 6, kind: output, shape index: {0}]
  %s7 = inlined_call_operand.hbm [shape: f32[8,128], index: 7, kind: output, shape index: {1}]
  %s8 = inlined_call_operand.hbm [shape: f32[8,128], index: 8, kind: output, shape index: {2}]
  %9 = xla_tuple %s6, %s7, %s8
  %s10 = sld [smem:[#allocation0]]
  $region62: #{tpu_custom_call.1} parent=0
    _
  %s12 = ssub.s32 1, %s10
  %s13 = scalar_select 0, %s12, %s10
  $region1: #{tpu_custom_call.1} parent=0
    #allocation5 [shape = 'u8[262144]{0}', space=vmem, size = 0x40000, scoped, tag = 'input window, operand 2, single buffered']
    #allocation6 [shape = 's32[1]{0}', space=sflag, size = 0x4, scoped, tag = 'scoped memory for tpu_custom_call.1']
    #allocation7 [shape = 's32[1]{0}', space=sflag, size = 0x4, scoped, tag = 'scoped memory for tpu_custom_call.1']
    #allocation8 [shape = 'u8[32768]{0}', space=vmem, size = 0x8000, scoped, tag = 'output window, operand 0, single buffered']
    #allocation9 [shape = 'u8[4096]{0}', space=vmem, size = 0x1000, scoped, tag = 'output window, operand 1, single buffered']
    #allocation10 [shape = 's32[1]{0}', space=sflag, size = 0x4, scoped, tag = 'scoped memory for tpu_custom_call.1']
    #allocation11 [shape = 'u8[4096]{0}', space=vmem, size = 0x1000, scoped, tag = 'output window, operand 2, single buffered']
    %14 = vsyncpa [#allocation6], 0
    %15 = vsyncpa [#allocation7], 0
    %16 = vsyncpa [#allocation10], 0
    // Predicated region
    $region2: #{tpu_custom_call.1} parent=1 // pred_check
      _
    $region3: #{tpu_custom_call.1} parent=1 // pred_check_branch
      %18 = sbr.rel (0) target = $region5
    $region4: #{tpu_custom_call.1} parent=1 // pred_region
      _
    $region5: #{tpu_custom_call.1} parent=1 // pred_fallthru
      _
    // Predicated region
    $region6: #{tpu_custom_call.1} parent=1 // pred_check
      _
    $region7: #{tpu_custom_call.1} parent=1 // pred_check_branch
      %20 = sbr.rel (0) target = $region9
    $region8: #{tpu_custom_call.1} parent=1 // pred_region
      _
    $region9: #{tpu_custom_call.1} parent=1 // pred_fallthru
      _
    // Predicated region
    $region10: #{tpu_custom_call.1} parent=1 // pred_check
      _
    $region11: #{tpu_custom_call.1} parent=1 // pred_check_branch
      %22 = sbr.rel (0) target = $region13
    $region12: #{tpu_custom_call.1} parent=1 // pred_region
      %s24 = ssub.s32 8192, 8192
      %25 = vsyncadd [#allocation6], %s24
      %s26 = sshll.u32 [#allocation5], 4
      %s27 = int_to_ptr.vmem [resolvable:$true] %s26
      %32 = dma.hbm_to_vmem [thread:$0]  %s2, 8192, %s27, [#allocation6], 512, 512, 32
    $region13: #{tpu_custom_call.1} parent=1 // pred_fallthru
      _
    // Predicated region
    $region14: #{tpu_custom_call.1} parent=1 // pred_check
      _
    $region15: #{tpu_custom_call.1} parent=1 // pred_check_branch
      %34 = sbr.rel (0) target = $region17
    $region16: #{tpu_custom_call.1} parent=1 // pred_region
      _
    $region17: #{tpu_custom_call.1} parent=1 // pred_fallthru
      _
    // Predicated region
    $region18: #{tpu_custom_call.1} parent=1 // pred_check
      _
    $region19: #{tpu_custom_call.1} parent=1 // pred_check_branch
      %36 = sbr.rel (0) target = $region21
    $region20: #{tpu_custom_call.1} parent=1 // pred_region
      _
    $region21: #{tpu_custom_call.1} parent=1 // pred_fallthru
      _
    // Predicated region
    $region22: #{tpu_custom_call.1} parent=1 // pred_check
      _
    $region23: #{tpu_custom_call.1} parent=1 // pred_check_branch
      %38 = sbr.rel (0) target = $region25
    $region24: #{tpu_custom_call.1} parent=1 // pred_region
      _
    $region25: #{tpu_custom_call.1} parent=1 // pred_fallthru
      _
    // Predicated region
    $region26: #{tpu_custom_call.1} parent=1 // pred_check
      _
    $region27: #{tpu_custom_call.1} parent=1 // pred_check_branch
      %40 = sbr.rel (0) target = $region29
    $region28: #{tpu_custom_call.1} parent=1 // pred_region
      %41 = dma.done [#allocation6], 8192
    $region29: #{tpu_custom_call.1} parent=1 // pred_fallthru
      _
    %p42 = scmp.eq.s32.totalorder 0, 0
    // Predicated region
    $region30: #{tpu_custom_call.1} parent=1 // pred_check
      %p43 = pneg %p42
    $region31: #{tpu_custom_call.1} parent=1 // pred_check_branch
      %45 = sbr.rel (%p43) target = $region33
    $region32: #{tpu_custom_call.1} parent=1 // pred_region
      %v46 = vld [vmem:[%s4] sm:$0xff]
      %47 = vst [vmem:[#allocation2] sm:$0xff] %v46
      %v48 = vld [vmem:[%s5] sm:$0xff]
      %49 = vst [vmem:[#allocation3] sm:$0xff] %v48
    $region33: #{tpu_custom_call.1} parent=1 // pred_fallthru
      _
    %v50 = vld [vmem:[%s0] sm:$0xff]
    %v51 = vld [vmem:[%s0 + $0x8] sm:$0xff]
    %v52 = vld [vmem:[%s0 + $0x10] sm:$0xff]
    %v53 = vld [vmem:[%s0 + $0x18] sm:$0xff]
    %v54 = vld [vmem:[%s0 + $0x20] sm:$0xff]
    %v55 = vld [vmem:[%s0 + $0x28] sm:$0xff]
    %v56 = vld [vmem:[%s0 + $0x30] sm:$0xff]
    %v57 = vld [vmem:[%s0 + $0x38] sm:$0xff]
    %v58 = vld [vmem:[%s1] sm:$0xff]
    %v59 = vld [vmem:[%s1 + $0x8] sm:$0xff]
    %v60 = vld [vmem:[%s1 + $0x10] sm:$0xff]
    %v61 = vld [vmem:[%s1 + $0x18] sm:$0xff]
    %v62 = vld [vmem:[%s1 + $0x20] sm:$0xff]
    %v63 = vld [vmem:[%s1 + $0x28] sm:$0xff]
    %v64 = vld [vmem:[%s1 + $0x30] sm:$0xff]
    %v65 = vld [vmem:[%s1 + $0x38] sm:$0xff]
    %v66 = vld [vmem:[%s3] sm:$0xf]
    %v68 = vlaneseq
    %v69 = vshrl.u32 %v68, 7
    %v70 = vsub.s32 0, %v69
    %v71 = vrot.slane %v66, %v70
    %v72 = vlaneseq
    %v73 = vshrl.u32 %v72, 7
    %v74 = vsub.s32 1, %v73
    %v75 = vrot.slane %v66, %v74
    %v76 = vlaneseq
    %v77 = vshrl.u32 %v76, 7
    %v78 = vsub.s32 2, %v77
    %v79 = vrot.slane %v66, %v78
    %v80 = vlaneseq
    %v81 = vshrl.u32 %v80, 7
    %v82 = vsub.s32 3, %v81
    %v83 = vrot.slane %v66, %v82
    %vm88 = vcmask 130048
    %v90 = vsel %vm88, %v50, 0
    %v93 = vsel %vm88, %v51, 0
    %v96 = vsel %vm88, %v52, 0
    %v99 = vsel %vm88, %v53, 0
    %v102 = vsel %vm88, %v54, 0
    %v105 = vsel %vm88, %v55, 0
    %v108 = vsel %vm88, %v56, 0
    %v111 = vsel %vm88, %v57, 0
    %113 = vmatprep.subr.mxu0 %v59
    %114 = vmatpush1.msra.mxu0 %v58
    %115 = vmatprep.subr.mxu0 %v63
    %116 = vmatpush1.msra.mxu0 %v62
    %117 = vmatprep.subr.mxu0 0.0
    %118 = vmatpush1.msra.mxu0 0.0
    %119 = vmatprep.subr.mxu0 0.0
    %120 = vmatpush1.msra.mxu0 0.0
    %121 = vmatprep.subr.mxu0 0.0
    %122 = vmatpush1.msra.mxu0 0.0
    %123 = vmatprep.subr.mxu0 0.0
    %124 = vmatpush1.msra.mxu0 0.0
    %125 = vmatprep.subr.mxu0 0.0
    %126 = vmatpush1.msra.mxu0 0.0
    %127 = vmatprep.subr.mxu0 0.0
    %128 = vmatpush1.msra.mxu0 0.0
    %129 = vmatprep.subr.mxu0 0.0
    %130 = vmatpush1.msra.mxu0 0.0
    %131 = vmatprep.subr.mxu0 0.0
    %132 = vmatpush1.msra.mxu0 0.0
    %133 = vmatprep.subr.mxu0 0.0
    %134 = vmatpush1.msra.mxu0 0.0
    %135 = vmatprep.subr.mxu0 0.0
    %136 = vmatpush1.msra.mxu0 0.0
    %137 = vmatprep.subr.mxu0 0.0
    %138 = vmatpush1.msra.mxu0 0.0
    %139 = vmatprep.subr.mxu0 0.0
    %140 = vmatpush1.msra.mxu0 0.0
    %141 = vmatprep.subr.mxu0 0.0
    %142 = vmatpush1.msra.mxu0 0.0
    %143 = vmatprep.subr.mxu0 0.0
    %144 = vmatpush1.msra.mxu0 0.0
    %145 = vmatprep.subr.mxu0 0.0
    %146 = vmatpush1.msra.mxu0 0.0
    %147 = vmatprep.subr.mxu0 0.0
    %148 = vmatpush1.msra.mxu0 0.0
    %149 = vmatprep.subr.mxu0 0.0
    %150 = vmatpush1.msra.mxu0 0.0
    %151 = vmatprep.subr.mxu0 0.0
    %152 = vmatpush1.msra.mxu0 0.0
    %153 = vmatprep.subr.mxu0 0.0
    %154 = vmatpush1.msra.mxu0 0.0
    %155 = vmatprep.subr.mxu0 0.0
    %156 = vmatpush1.msra.mxu0 0.0
    %157 = vmatprep.subr.mxu0 0.0
    %158 = vmatpush1.msra.mxu0 0.0
    %159 = vmatprep.subr.mxu0 0.0
    %160 = vmatpush1.msra.mxu0 0.0
    %161 = vmatprep.subr.mxu0 0.0
    %162 = vmatpush1.msra.mxu0 0.0
    %163 = vmatprep.subr.mxu0 0.0
    %164 = vmatpush1.msra.mxu0 0.0
    %165 = vmatprep.subr.mxu0 0.0
    %166 = vmatpush1.msra.mxu0 0.0
    %167 = vmatprep.subr.mxu0 0.0
    %168 = vmatpush1.msra.mxu0 0.0
    %169 = vmatprep.subr.mxu0 0.0
    %170 = vmatpush1.msra.mxu0 0.0
    %171 = vmatprep.subr.mxu0 0.0
    %172 = vmatpush1.msra.mxu0 0.0
    %173 = vmatprep.subr.mxu0 0.0
    %174 = vmatpush1.msra.mxu0 0.0
    %175 = vmatprep.subr.mxu0 0.0
    %176 = vmatpush1.msra.mxu0 0.0
    %177 = vmatprep.mubr.f32.mxu0 0.0
    %178 = vmatmul.mubr.f32.gmra.mrb[0].mxu0 %v90
    %v179 = vpop.f32.mrb[0].mxu0
    %v180 = vadd.f32 %v71, %v179
    %v181 = vpop.f32.mrb[0].mxu0
    %v182 = vadd.f32 %v75, %v181
    %183 = vmatprep.mubr.f32.mxu0 0.0
    %184 = vmatmul.mubr.f32.gmra.mrb[0].mxu0 %v93
    %v185 = vpop.f32.mrb[0].mxu0
    %v186 = vadd.f32 %v71, %v185
    %v187 = vpop.f32.mrb[0].mxu0
    %v188 = vadd.f32 %v75, %v187
    %189 = vmatprep.mubr.f32.mxu0 0.0
    %190 = vmatmul.mubr.f32.gmra.mrb[0].mxu0 %v96
    %v191 = vpop.f32.mrb[0].mxu0
    %v192 = vadd.f32 %v71, %v191
    %v193 = vpop.f32.mrb[0].mxu0
    %v194 = vadd.f32 %v75, %v193
    %195 = vmatprep.mubr.f32.mxu0 0.0
    %196 = vmatmul.mubr.f32.gmra.mrb[0].mxu0 %v99
    %v197 = vpop.f32.mrb[0].mxu0
    %v198 = vadd.f32 %v71, %v197
    %v199 = vpop.f32.mrb[0].mxu0
    %v200 = vadd.f32 %v75, %v199
    %201 = vmatprep.mubr.f32.mxu0 0.0
    %202 = vmatmul.mubr.f32.gmra.mrb[0].mxu0 %v102
    %v203 = vpop.f32.mrb[0].mxu0
    %v204 = vadd.f32 %v71, %v203
    %v205 = vpop.f32.mrb[0].mxu0
    %v206 = vadd.f32 %v75, %v205
    %207 = vmatprep.mubr.f32.mxu0 0.0
    %208 = vmatmul.mubr.f32.gmra.mrb[0].mxu0 %v105
    %v209 = vpop.f32.mrb[0].mxu0
    %v210 = vadd.f32 %v71, %v209
    %v211 = vpop.f32.mrb[0].mxu0
    %v212 = vadd.f32 %v75, %v211
    %213 = vmatprep.mubr.f32.mxu0 0.0
    %214 = vmatmul.mubr.f32.gmra.mrb[0].mxu0 %v108
    %v215 = vpop.f32.mrb[0].mxu0
    %v216 = vadd.f32 %v71, %v215
    %v217 = vpop.f32.mrb[0].mxu0
    %v218 = vadd.f32 %v75, %v217
    %219 = vmatprep.mubr.f32.mxu0 0.0
    %220 = vmatmul.mubr.f32.gmra.mrb[0].mxu0 %v111
    %v221 = vpop.f32.mrb[0].mxu0
    %v222 = vadd.f32 %v71, %v221
    %v223 = vpop.f32.mrb[0].mxu0
    %v224 = vadd.f32 %v75, %v223
    %225 = vdwg.mxu0
    %226 = vmatprep.subr.mxu0 %v61
    %227 = vmatpush1.msra.mxu0 %v60
    %228 = vmatprep.subr.mxu0 %v65
    %229 = vmatpush1.msra.mxu0 %v64
    %230 = vmatprep.subr.mxu0 0.0
    %231 = vmatpush1.msra.mxu0 0.0
    %232 = vmatprep.subr.mxu0 0.0
    %233 = vmatpush1.msra.mxu0 0.0
    %234 = vmatprep.subr.mxu0 0.0
    %235 = vmatpush1.msra.mxu0 0.0
    %236 = vmatprep.subr.mxu0 0.0
    %237 = vmatpush1.msra.mxu0 0.0
    %238 = vmatprep.subr.mxu0 0.0
    %239 = vmatpush1.msra.mxu0 0.0
    %240 = vmatprep.subr.mxu0 0.0
    %241 = vmatpush1.msra.mxu0 0.0
    %242 = vmatprep.subr.mxu0 0.0
    %243 = vmatpush1.msra.mxu0 0.0
    %244 = vmatprep.subr.mxu0 0.0
    %245 = vmatpush1.msra.mxu0 0.0
    %246 = vmatprep.subr.mxu0 0.0
    %247 = vmatpush1.msra.mxu0 0.0
    %248 = vmatprep.subr.mxu0 0.0
    %249 = vmatpush1.msra.mxu0 0.0
    %250 = vmatprep.subr.mxu0 0.0
    %251 = vmatpush1.msra.mxu0 0.0
    %252 = vmatprep.subr.mxu0 0.0
    %253 = vmatpush1.msra.mxu0 0.0
    %254 = vmatprep.subr.mxu0 0.0
    %255 = vmatpush1.msra.mxu0 0.0
    %256 = vmatprep.subr.mxu0 0.0
    %257 = vmatpush1.msra.mxu0 0.0
    %258 = vmatprep.subr.mxu0 0.0
    %259 = vmatpush1.msra.mxu0 0.0
    %260 = vmatprep.subr.mxu0 0.0
    %261 = vmatpush1.msra.mxu0 0.0
    %262 = vmatprep.subr.mxu0 0.0
    %263 = vmatpush1.msra.mxu0 0.0
    %264 = vmatprep.subr.mxu0 0.0
    %265 = vmatpush1.msra.mxu0 0.0
    %266 = vmatprep.subr.mxu0 0.0
    %267 = vmatpush1.msra.mxu0 0.0
    %268 = vmatprep.subr.mxu0 0.0
    %269 = vmatpush1.msra.mxu0 0.0
    %270 = vmatprep.subr.mxu0 0.0
    %271 = vmatpush1.msra.mxu0 0.0
    %272 = vmatprep.subr.mxu0 0.0
    %273 = vmatpush1.msra.mxu0 0.0
    %274 = vmatprep.subr.mxu0 0.0
    %275 = vmatpush1.msra.mxu0 0.0
    %276 = vmatprep.subr.mxu0 0.0
    %277 = vmatpush1.msra.mxu0 0.0
    %278 = vmatprep.subr.mxu0 0.0
    %279 = vmatpush1.msra.mxu0 0.0
    %280 = vmatprep.subr.mxu0 0.0
    %281 = vmatpush1.msra.mxu0 0.0
    %282 = vmatprep.subr.mxu0 0.0
    %283 = vmatpush1.msra.mxu0 0.0
    %284 = vmatprep.subr.mxu0 0.0
    %285 = vmatpush1.msra.mxu0 0.0
    %286 = vmatprep.subr.mxu0 0.0
    %287 = vmatpush1.msra.mxu0 0.0
    %288 = vmatprep.subr.mxu0 0.0
    %289 = vmatpush1.msra.mxu0 0.0
    %290 = vmatprep.mubr.f32.mxu0 0.0
    %291 = vmatmul.mubr.f32.gmra.mrb[0].mxu0 %v90
    %v292 = vpop.f32.mrb[0].mxu0
    %v293 = vadd.f32 %v79, %v292
    %v294 = vpop.f32.mrb[0].mxu0
    %v295 = vadd.f32 %v83, %v294
    %296 = vmatprep.mubr.f32.mxu0 0.0
    %297 = vmatmul.mubr.f32.gmra.mrb[0].mxu0 %v93
    %v298 = vpop.f32.mrb[0].mxu0
    %v299 = vadd.f32 %v79, %v298
    %v300 = vpop.f32.mrb[0].mxu0
    %v301 = vadd.f32 %v83, %v300
    %302 = vmatprep.mubr.f32.mxu0 0.0
    %303 = vmatmul.mubr.f32.gmra.mrb[0].mxu0 %v96
    %v304 = vpop.f32.mrb[0].mxu0
    %v305 = vadd.f32 %v79, %v304
    %v306 = vpop.f32.mrb[0].mxu0
    %v307 = vadd.f32 %v83, %v306
    %308 = vmatprep.mubr.f32.mxu0 0.0
    %309 = vmatmul.mubr.f32.gmra.mrb[0].mxu0 %v99
    %v310 = vpop.f32.mrb[0].mxu0
    %v311 = vadd.f32 %v79, %v310
    %v312 = vpop.f32.mrb[0].mxu0
    %v313 = vadd.f32 %v83, %v312
    %314 = vmatprep.mubr.f32.mxu0 0.0
    %315 = vmatmul.mubr.f32.gmra.mrb[0].mxu0 %v102
    %v316 = vpop.f32.mrb[0].mxu0
    %v317 = vadd.f32 %v79, %v316
    %v318 = vpop.f32.mrb[0].mxu0
    %v319 = vadd.f32 %v83, %v318
    %320 = vmatprep.mubr.f32.mxu0 0.0
    %321 = vmatmul.mubr.f32.gmra.mrb[0].mxu0 %v105
    %v322 = vpop.f32.mrb[0].mxu0
    %v323 = vadd.f32 %v79, %v322
    %v324 = vpop.f32.mrb[0].mxu0
    %v325 = vadd.f32 %v83, %v324
    %326 = vmatprep.mubr.f32.mxu0 0.0
    %327 = vmatmul.mubr.f32.gmra.mrb[0].mxu0 %v108
    %v328 = vpop.f32.mrb[0].mxu0
    %v329 = vadd.f32 %v79, %v328
    %v330 = vpop.f32.mrb[0].mxu0
    %v331 = vadd.f32 %v83, %v330
    %332 = vmatprep.mubr.f32.mxu0 0.0
    %333 = vmatmul.mubr.f32.gmra.mrb[0].mxu0 %v111
    %v334 = vpop.f32.mrb[0].mxu0
    %v335 = vadd.f32 %v79, %v334
    %v336 = vpop.f32.mrb[0].mxu0
    %v337 = vadd.f32 %v83, %v336
    %338 = vdwg.mxu0
    %339 = vst [vmem:[#allocation4] sm:$0xff] %v180
    %340 = vst [vmem:[#allocation4 + $0x8] sm:$0xff] %v182
    %341 = vst [vmem:[#allocation4 + $0x10] sm:$0xff] %v293
    %342 = vst [vmem:[#allocation4 + $0x18] sm:$0xff] %v295
    %343 = vst [vmem:[#allocation4 + $0x20] sm:$0xff] %v186
    %344 = vst [vmem:[#allocation4 + $0x28] sm:$0xff] %v188
    %345 = vst [vmem:[#allocation4 + $0x30] sm:$0xff] %v299
    %346 = vst [vmem:[#allocation4 + $0x38] sm:$0xff] %v301
    %347 = vst [vmem:[#allocation4 + $0x40] sm:$0xff] %v192
    %348 = vst [vmem:[#allocation4 + $0x48] sm:$0xff] %v194
    %349 = vst [vmem:[#allocation4 + $0x50] sm:$0xff] %v305
    %350 = vst [vmem:[#allocation4 + $0x58] sm:$0xff] %v307
    %351 = vst [vmem:[#allocation4 + $0x60] sm:$0xff] %v198
    %352 = vst [vmem:[#allocation4 + $0x68] sm:$0xff] %v200
    %353 = vst [vmem:[#allocation4 + $0x70] sm:$0xff] %v311
    %354 = vst [vmem:[#allocation4 + $0x78] sm:$0xff] %v313
    %355 = vst [vmem:[#allocation4 + $0x80] sm:$0xff] %v204
    %356 = vst [vmem:[#allocation4 + $0x88] sm:$0xff] %v206
    %357 = vst [vmem:[#allocation4 + $0x90] sm:$0xff] %v317
    %358 = vst [vmem:[#allocation4 + $0x98] sm:$0xff] %v319
    %359 = vst [vmem:[#allocation4 + $0xa0] sm:$0xff] %v210
    %360 = vst [vmem:[#allocation4 + $0xa8] sm:$0xff] %v212
    %361 = vst [vmem:[#allocation4 + $0xb0] sm:$0xff] %v323
    %362 = vst [vmem:[#allocation4 + $0xb8] sm:$0xff] %v325
    %363 = vst [vmem:[#allocation4 + $0xc0] sm:$0xff] %v216
    %364 = vst [vmem:[#allocation4 + $0xc8] sm:$0xff] %v218
    %365 = vst [vmem:[#allocation4 + $0xd0] sm:$0xff] %v329
    %366 = vst [vmem:[#allocation4 + $0xd8] sm:$0xff] %v331
    %367 = vst [vmem:[#allocation4 + $0xe0] sm:$0xff] %v222
    %368 = vst [vmem:[#allocation4 + $0xe8] sm:$0xff] %v224
    %369 = vst [vmem:[#allocation4 + $0xf0] sm:$0xff] %v335
    %370 = vst [vmem:[#allocation4 + $0xf8] sm:$0xff] %v337
    %v371 = vld [vmem:[#allocation5] sm:$0xff]
    %v372 = vld [vmem:[#allocation5 + $0x8] sm:$0xff]
    %v373 = vld [vmem:[#allocation5 + $0x10] sm:$0xff]
    %v374 = vld [vmem:[#allocation5 + $0x18] sm:$0xff]
    %v375 = vld [vmem:[#allocation5 + $0x20] sm:$0xff]
    %v376 = vld [vmem:[#allocation5 + $0x28] sm:$0xff]
    %v377 = vld [vmem:[#allocation5 + $0x30] sm:$0xff]
    %v378 = vld [vmem:[#allocation5 + $0x38] sm:$0xff]
    %v379 = vld [vmem:[#allocation5 + $0x40] sm:$0xff]
    %v380 = vld [vmem:[#allocation5 + $0x48] sm:$0xff]
    %v381 = vld [vmem:[#allocation5 + $0x50] sm:$0xff]
    %v382 = vld [vmem:[#allocation5 + $0x58] sm:$0xff]
    %v383 = vld [vmem:[#allocation5 + $0x60] sm:$0xff]
    %v384 = vld [vmem:[#allocation5 + $0x68] sm:$0xff]
    %v385 = vld [vmem:[#allocation5 + $0x70] sm:$0xff]
    %v386 = vld [vmem:[#allocation5 + $0x78] sm:$0xff]
    %v387 = vld [vmem:[#allocation5 + $0x80] sm:$0xff]
    %v388 = vld [vmem:[#allocation5 + $0x88] sm:$0xff]
    %v389 = vld [vmem:[#allocation5 + $0x90] sm:$0xff]
    %v390 = vld [vmem:[#allocation5 + $0x98] sm:$0xff]
    %v391 = vld [vmem:[#allocation5 + $0xa0] sm:$0xff]
    %v392 = vld [vmem:[#allocation5 + $0xa8] sm:$0xff]
    %v393 = vld [vmem:[#allocation5 + $0xb0] sm:$0xff]
    %v394 = vld [vmem:[#allocation5 + $0xb8] sm:$0xff]
    %v395 = vld [vmem:[#allocation5 + $0xc0] sm:$0xff]
    %v396 = vld [vmem:[#allocation5 + $0xc8] sm:$0xff]
    %v397 = vld [vmem:[#allocation5 + $0xd0] sm:$0xff]
    %v398 = vld [vmem:[#allocation5 + $0xd8] sm:$0xff]
    %v399 = vld [vmem:[#allocation5 + $0xe0] sm:$0xff]
    %v400 = vld [vmem:[#allocation5 + $0xe8] sm:$0xff]
    %v401 = vld [vmem:[#allocation5 + $0xf0] sm:$0xff]
    %v402 = vld [vmem:[#allocation5 + $0xf8] sm:$0xff]
    %v403 = vld [vmem:[#allocation5 + $0x100] sm:$0xff]
    %v404 = vld [vmem:[#allocation5 + $0x108] sm:$0xff]
    %v405 = vld [vmem:[#allocation5 + $0x110] sm:$0xff]
    %v406 = vld [vmem:[#allocation5 + $0x118] sm:$0xff]
    %v407 = vld [vmem:[#allocation5 + $0x120] sm:$0xff]
    %v408 = vld [vmem:[#allocation5 + $0x128] sm:$0xff]
    %v409 = vld [vmem:[#allocation5 + $0x130] sm:$0xff]
    %v410 = vld [vmem:[#allocation5 + $0x138] sm:$0xff]
    %v411 = vld [vmem:[#allocation5 + $0x140] sm:$0xff]
    %v412 = vld [vmem:[#allocation5 + $0x148] sm:$0xff]
    %v413 = vld [vmem:[#allocation5 + $0x150] sm:$0xff]
    %v414 = vld [vmem:[#allocation5 + $0x158] sm:$0xff]
    %v415 = vld [vmem:[#allocation5 + $0x160] sm:$0xff]
    %v416 = vld [vmem:[#allocation5 + $0x168] sm:$0xff]
    %v417 = vld [vmem:[#allocation5 + $0x170] sm:$0xff]
    %v418 = vld [vmem:[#allocation5 + $0x178] sm:$0xff]
    %v419 = vld [vmem:[#allocation5 + $0x180] sm:$0xff]
    %v420 = vld [vmem:[#allocation5 + $0x188] sm:$0xff]
    %v421 = vld [vmem:[#allocation5 + $0x190] sm:$0xff]
    %v422 = vld [vmem:[#allocation5 + $0x198] sm:$0xff]
    %v423 = vld [vmem:[#allocation5 + $0x1a0] sm:$0xff]
    %v424 = vld [vmem:[#allocation5 + $0x1a8] sm:$0xff]
    %v425 = vld [vmem:[#allocation5 + $0x1b0] sm:$0xff]
    %v426 = vld [vmem:[#allocation5 + $0x1b8] sm:$0xff]
    %v427 = vld [vmem:[#allocation5 + $0x1c0] sm:$0xff]
    %v428 = vld [vmem:[#allocation5 + $0x1c8] sm:$0xff]
    %v429 = vld [vmem:[#allocation5 + $0x1d0] sm:$0xff]
    %v430 = vld [vmem:[#allocation5 + $0x1d8] sm:$0xff]
    %v431 = vld [vmem:[#allocation5 + $0x1e0] sm:$0xff]
    %v432 = vld [vmem:[#allocation5 + $0x1e8] sm:$0xff]
    %v433 = vld [vmem:[#allocation5 + $0x1f0] sm:$0xff]
    %v434 = vld [vmem:[#allocation5 + $0x1f8] sm:$0xff]
    %v435 = vld [vmem:[#allocation2] sm:$0xff]
    %v436 = vld [vmem:[#allocation3] sm:$0xff]
    %s437 = smul.u32 0, 4
    %s438 = smul.addr %s437, 8
    %s439 = scalar_lea.vmem [#allocation4], %s438
    %v440 = vld [vmem:[%s439] sm:$0xff]
    %v441 = vld [vmem:[%s439 + $0x8] sm:$0xff]
    %v442 = vld [vmem:[%s439 + $0x10] sm:$0xff]
    %v443 = vld [vmem:[%s439 + $0x18] sm:$0xff]
    %444 = vmatprep.subr.mxu0 %v372
    %445 = vmatpush1.msra.mxu0 %v371
    %446 = vmatprep.subr.mxu0 %v376
    %447 = vmatpush1.msra.mxu0 %v375
    %448 = vmatprep.subr.mxu0 %v380
    %449 = vmatpush1.msra.mxu0 %v379
    %450 = vmatprep.subr.mxu0 %v384
    %451 = vmatpush1.msra.mxu0 %v383
    %452 = vmatprep.subr.mxu0 %v388
    %453 = vmatpush1.msra.mxu0 %v387
    %454 = vmatprep.subr.mxu0 %v392
    %455 = vmatpush1.msra.mxu0 %v391
    %456 = vmatprep.subr.mxu0 %v396
    %457 = vmatpush1.msra.mxu0 %v395
    %458 = vmatprep.subr.mxu0 %v400
    %459 = vmatpush1.msra.mxu0 %v399
    %460 = vmatprep.subr.mxu0 %v404
    %461 = vmatpush1.msra.mxu0 %v403
    %462 = vmatprep.subr.mxu0 %v408
    %463 = vmatpush1.msra.mxu0 %v407
    %464 = vmatprep.subr.mxu0 %v412
    %465 = vmatpush1.msra.mxu0 %v411
    %466 = vmatprep.subr.mxu0 %v416
    %467 = vmatpush1.msra.mxu0 %v415
    %468 = vmatprep.subr.mxu0 %v420
    %469 = vmatpush1.msra.mxu0 %v419
    %470 = vmatprep.subr.mxu0 %v424
    %471 = vmatpush1.msra.mxu0 %v423
    %472 = vmatprep.subr.mxu0 %v428
    %473 = vmatpush1.msra.mxu0 %v427
    %474 = vmatprep.subr.mxu0 %v432
    %475 = vmatpush1.msra.mxu0 %v431
    %476 = vmatprep.subr.mxu0 0.0
    %477 = vmatpush1.msra.mxu0 0.0
    %478 = vmatprep.subr.mxu0 0.0
    %479 = vmatpush1.msra.mxu0 0.0
    %480 = vmatprep.subr.mxu0 0.0
    %481 = vmatpush1.msra.mxu0 0.0
    %482 = vmatprep.subr.mxu0 0.0
    %483 = vmatpush1.msra.mxu0 0.0
    %484 = vmatprep.subr.mxu0 0.0
    %485 = vmatpush1.msra.mxu0 0.0
    %486 = vmatprep.subr.mxu0 0.0
    %487 = vmatpush1.msra.mxu0 0.0
    %488 = vmatprep.subr.mxu0 0.0
    %489 = vmatpush1.msra.mxu0 0.0
    %490 = vmatprep.subr.mxu0 0.0
    %491 = vmatpush1.msra.mxu0 0.0
    %492 = vmatprep.subr.mxu0 0.0
    %493 = vmatpush1.msra.mxu0 0.0
    %494 = vmatprep.subr.mxu0 0.0
    %495 = vmatpush1.msra.mxu0 0.0
    %496 = vmatprep.subr.mxu0 0.0
    %497 = vmatpush1.msra.mxu0 0.0
    %498 = vmatprep.subr.mxu0 0.0
    %499 = vmatpush1.msra.mxu0 0.0
    %500 = vmatprep.subr.mxu0 0.0
    %501 = vmatpush1.msra.mxu0 0.0
    %502 = vmatprep.subr.mxu0 0.0
    %503 = vmatpush1.msra.mxu0 0.0
    %504 = vmatprep.subr.mxu0 0.0
    %505 = vmatpush1.msra.mxu0 0.0
    %506 = vmatprep.subr.mxu0 0.0
    %507 = vmatpush1.msra.mxu0 0.0
    %508 = vmatprep.mubr.f32.mxu0 0.0
    %509 = vmatmul.mubr.f32.gmra.mrb[0].mxu0 %v435
    %v510 = vpop.f32.mrb[0].mxu0
    %v511 = vadd.f32 0.0, %v510
    %v512 = vpop.f32.mrb[0].mxu0
    %v513 = vadd.f32 0.0, %v512
    %514 = vdwg.mxu0
    %515 = vmatprep.subr.mxu0 %v374
    %516 = vmatpush1.msra.mxu0 %v373
    %517 = vmatprep.subr.mxu0 %v378
    %518 = vmatpush1.msra.mxu0 %v377
    %519 = vmatprep.subr.mxu0 %v382
    %520 = vmatpush1.msra.mxu0 %v381
    %521 = vmatprep.subr.mxu0 %v386
    %522 = vmatpush1.msra.mxu0 %v385
    %523 = vmatprep.subr.mxu0 %v390
    %524 = vmatpush1.msra.mxu0 %v389
    %525 = vmatprep.subr.mxu0 %v394
    %526 = vmatpush1.msra.mxu0 %v393
    %527 = vmatprep.subr.mxu0 %v398
    %528 = vmatpush1.msra.mxu0 %v397
    %529 = vmatprep.subr.mxu0 %v402
    %530 = vmatpush1.msra.mxu0 %v401
    %531 = vmatprep.subr.mxu0 %v406
    %532 = vmatpush1.msra.mxu0 %v405
    %533 = vmatprep.subr.mxu0 %v410
    %534 = vmatpush1.msra.mxu0 %v409
    %535 = vmatprep.subr.mxu0 %v414
    %536 = vmatpush1.msra.mxu0 %v413
    %537 = vmatprep.subr.mxu0 %v418
    %538 = vmatpush1.msra.mxu0 %v417
    %539 = vmatprep.subr.mxu0 %v422
    %540 = vmatpush1.msra.mxu0 %v421
    %541 = vmatprep.subr.mxu0 %v426
    %542 = vmatpush1.msra.mxu0 %v425
    %543 = vmatprep.subr.mxu0 %v430
    %544 = vmatpush1.msra.mxu0 %v429
    %545 = vmatprep.subr.mxu0 %v434
    %546 = vmatpush1.msra.mxu0 %v433
    %547 = vmatprep.subr.mxu0 0.0
    %548 = vmatpush1.msra.mxu0 0.0
    %549 = vmatprep.subr.mxu0 0.0
    %550 = vmatpush1.msra.mxu0 0.0
    %551 = vmatprep.subr.mxu0 0.0
    %552 = vmatpush1.msra.mxu0 0.0
    %553 = vmatprep.subr.mxu0 0.0
    %554 = vmatpush1.msra.mxu0 0.0
    %555 = vmatprep.subr.mxu0 0.0
    %556 = vmatpush1.msra.mxu0 0.0
    %557 = vmatprep.subr.mxu0 0.0
    %558 = vmatpush1.msra.mxu0 0.0
    %559 = vmatprep.subr.mxu0 0.0
    %560 = vmatpush1.msra.mxu0 0.0
    %561 = vmatprep.subr.mxu0 0.0
    %562 = vmatpush1.msra.mxu0 0.0
    %563 = vmatprep.subr.mxu0 0.0
    %564 = vmatpush1.msra.mxu0 0.0
    %565 = vmatprep.subr.mxu0 0.0
    %566 = vmatpush1.msra.mxu0 0.0
    %567 = vmatprep.subr.mxu0 0.0
    %568 = vmatpush1.msra.mxu0 0.0
    %569 = vmatprep.subr.mxu0 0.0
    %570 = vmatpush1.msra.mxu0 0.0
    %571 = vmatprep.subr.mxu0 0.0
    %572 = vmatpush1.msra.mxu0 0.0
    %573 = vmatprep.subr.mxu0 0.0
    %574 = vmatpush1.msra.mxu0 0.0
    %575 = vmatprep.subr.mxu0 0.0
    %576 = vmatpush1.msra.mxu0 0.0
    %577 = vmatprep.subr.mxu0 0.0
    %578 = vmatpush1.msra.mxu0 0.0
    %579 = vmatprep.mubr.f32.mxu0 0.0
    %580 = vmatmul.mubr.f32.gmra.mrb[0].mxu0 %v435
    %v581 = vpop.f32.mrb[0].mxu0
    %v582 = vadd.f32 0.0, %v581
    %v583 = vpop.f32.mrb[0].mxu0
    %v584 = vadd.f32 0.0, %v583
    %585 = vdwg.mxu0
    %v586 = vadd.f32 %v440, %v511
    %v587 = vadd.f32 %v441, %v513
    %v588 = vadd.f32 %v442, %v582
    %v589 = vadd.f32 %v443, %v584
    %v590 = vxor.u32 %v586, 2147483648
    %v591 = vmul.f32 %v590, 1.442695
    %v592 = vpow.pop %v591
    %v593 = vadd.f32 %v592, 1.0
    %v594 = vrcp.pop %v593
    %v595 = vmul.f32 1.0, %v594
    %v596 = vxor.u32 %v587, 2147483648
    %v597 = vmul.f32 %v596, 1.442695
    %v598 = vpow.pop %v597
    %v599 = vadd.f32 %v598, 1.0
    %v600 = vrcp.pop %v599
    %v601 = vmul.f32 1.0, %v600
    %v602 = vtanh.pop %v588
    %v603 = vxor.u32 %v589, 2147483648
    %v604 = vmul.f32 %v603, 1.442695
    %v605 = vpow.pop %v604
    %v606 = vadd.f32 %v605, 1.0
    %v607 = vrcp.pop %v606
    %v608 = vmul.f32 1.0, %v607
    %v609 = vmul.f32 %v601, %v436
    %v610 = vmul.f32 %v595, %v602
    %v611 = vadd.f32 %v609, %v610
    %v612 = vtanh.pop %v611
    %v613 = vmul.f32 %v608, %v612
    %614 = vst [vmem:[#allocation8] sm:$0xff] %v613
    %s615 = smul.u32 1, 4
    %s616 = smul.addr %s615, 8
    %s617 = scalar_lea.vmem [#allocation4], %s616
    %v618 = vld [vmem:[%s617] sm:$0xff]
    %v619 = vld [vmem:[%s617 + $0x8] sm:$0xff]
    %v620 = vld [vmem:[%s617 + $0x10] sm:$0xff]
    %v621 = vld [vmem:[%s617 + $0x18] sm:$0xff]
    %622 = vmatprep.subr.mxu0 %v372
    %623 = vmatpush1.msra.mxu0 %v371
    %624 = vmatprep.subr.mxu0 %v376
    %625 = vmatpush1.msra.mxu0 %v375
    %626 = vmatprep.subr.mxu0 %v380
    %627 = vmatpush1.msra.mxu0 %v379
    %628 = vmatprep.subr.mxu0 %v384
    %629 = vmatpush1.msra.mxu0 %v383
    %630 = vmatprep.subr.mxu0 %v388
    %631 = vmatpush1.msra.mxu0 %v387
    %632 = vmatprep.subr.mxu0 %v392
    %633 = vmatpush1.msra.mxu0 %v391
    %634 = vmatprep.subr.mxu0 %v396
    %635 = vmatpush1.msra.mxu0 %v395
    %636 = vmatprep.subr.mxu0 %v400
    %637 = vmatpush1.msra.mxu0 %v399
    %638 = vmatprep.subr.mxu0 %v404
    %639 = vmatpush1.msra.mxu0 %v403
    %640 = vmatprep.subr.mxu0 %v408
    %641 = vmatpush1.msra.mxu0 %v407
    %642 = vmatprep.subr.mxu0 %v412
    %643 = vmatpush1.msra.mxu0 %v411
    %644 = vmatprep.subr.mxu0 %v416
    %645 = vmatpush1.msra.mxu0 %v415
    %646 = vmatprep.subr.mxu0 %v420
    %647 = vmatpush1.msra.mxu0 %v419
    %648 = vmatprep.subr.mxu0 %v424
    %649 = vmatpush1.msra.mxu0 %v423
    %650 = vmatprep.subr.mxu0 %v428
    %651 = vmatpush1.msra.mxu0 %v427
    %652 = vmatprep.subr.mxu0 %v432
    %653 = vmatpush1.msra.mxu0 %v431
    %654 = vmatprep.subr.mxu0 0.0
    %655 = vmatpush1.msra.mxu0 0.0
    %656 = vmatprep.subr.mxu0 0.0
    %657 = vmatpush1.msra.mxu0 0.0
    %658 = vmatprep.subr.mxu0 0.0
    %659 = vmatpush1.msra.mxu0 0.0
    %660 = vmatprep.subr.mxu0 0.0
    %661 = vmatpush1.msra.mxu0 0.0
    %662 = vmatprep.subr.mxu0 0.0
    %663 = vmatpush1.msra.mxu0 0.0
    %664 = vmatprep.subr.mxu0 0.0
    %665 = vmatpush1.msra.mxu0 0.0
    %666 = vmatprep.subr.mxu0 0.0
    %667 = vmatpush1.msra.mxu0 0.0
    %668 = vmatprep.subr.mxu0 0.0
    %669 = vmatpush1.msra.mxu0 0.0
    %670 = vmatprep.subr.mxu0 0.0
    %671 = vmatpush1.msra.mxu0 0.0
    %672 = vmatprep.subr.mxu0 0.0
    %673 = vmatpush1.msra.mxu0 0.0
    %674 = vmatprep.subr.mxu0 0.0
    %675 = vmatpush1.msra.mxu0 0.0
    %676 = vmatprep.subr.mxu0 0.0
    %677 = vmatpush1.msra.mxu0 0.0
    %678 = vmatprep.subr.mxu0 0.0
    %679 = vmatpush1.msra.mxu0 0.0
    %680 = vmatprep.subr.mxu0 0.0
    %681 = vmatpush1.msra.mxu0 0.0
    %682 = vmatprep.subr.mxu0 0.0
    %683 = vmatpush1.msra.mxu0 0.0
    %684 = vmatprep.subr.mxu0 0.0
    %685 = vmatpush1.msra.mxu0 0.0
    %686 = vmatprep.mubr.f32.mxu0 0.0
    %687 = vmatmul.mubr.f32.gmra.mrb[0].mxu0 %v613
    %v688 = vpop.f32.mrb[0].mxu0
    %v689 = vadd.f32 0.0, %v688
    %v690 = vpop.f32.mrb[0].mxu0
    %v691 = vadd.f32 0.0, %v690
    %692 = vdwg.mxu0
    %693 = vmatprep.subr.mxu0 %v374
    %694 = vmatpush1.msra.mxu0 %v373
    %695 = vmatprep.subr.mxu0 %v378
    %696 = vmatpush1.msra.mxu0 %v377
    %697 = vmatprep.subr.mxu0 %v382
    %698 = vmatpush1.msra.mxu0 %v381
    %699 = vmatprep.subr.mxu0 %v386
    %700 = vmatpush1.msra.mxu0 %v385
    %701 = vmatprep.subr.mxu0 %v390
    %702 = vmatpush1.msra.mxu0 %v389
    %703 = vmatprep.subr.mxu0 %v394
    %704 = vmatpush1.msra.mxu0 %v393
    %705 = vmatprep.subr.mxu0 %v398
    %706 = vmatpush1.msra.mxu0 %v397
    %707 = vmatprep.subr.mxu0 %v402
    %708 = vmatpush1.msra.mxu0 %v401
    %709 = vmatprep.subr.mxu0 %v406
    %710 = vmatpush1.msra.mxu0 %v405
    %711 = vmatprep.subr.mxu0 %v410
    %712 = vmatpush1.msra.mxu0 %v409
    %713 = vmatprep.subr.mxu0 %v414
    %714 = vmatpush1.msra.mxu0 %v413
    %715 = vmatprep.subr.mxu0 %v418
    %716 = vmatpush1.msra.mxu0 %v417
    %717 = vmatprep.subr.mxu0 %v422
    %718 = vmatpush1.msra.mxu0 %v421
    %719 = vmatprep.subr.mxu0 %v426
    %720 = vmatpush1.msra.mxu0 %v425
    %721 = vmatprep.subr.mxu0 %v430
    %722 = vmatpush1.msra.mxu0 %v429
    %723 = vmatprep.subr.mxu0 %v434
    %724 = vmatpush1.msra.mxu0 %v433
    %725 = vmatprep.subr.mxu0 0.0
    %726 = vmatpush1.msra.mxu0 0.0
    %727 = vmatprep.subr.mxu0 0.0
    %728 = vmatpush1.msra.mxu0 0.0
    %729 = vmatprep.subr.mxu0 0.0
    %730 = vmatpush1.msra.mxu0 0.0
    %731 = vmatprep.subr.mxu0 0.0
    %732 = vmatpush1.msra.mxu0 0.0
    %733 = vmatprep.subr.mxu0 0.0
    %734 = vmatpush1.msra.mxu0 0.0
    %735 = vmatprep.subr.mxu0 0.0
    %736 = vmatpush1.msra.mxu0 0.0
    %737 = vmatprep.subr.mxu0 0.0
    %738 = vmatpush1.msra.mxu0 0.0
    %739 = vmatprep.subr.mxu0 0.0
    %740 = vmatpush1.msra.mxu0 0.0
    %741 = vmatprep.subr.mxu0 0.0
    %742 = vmatpush1.msra.mxu0 0.0
    %743 = vmatprep.subr.mxu0 0.0
    %744 = vmatpush1.msra.mxu0 0.0
    %745 = vmatprep.subr.mxu0 0.0
    %746 = vmatpush1.msra.mxu0 0.0
    %747 = vmatprep.subr.mxu0 0.0
    %748 = vmatpush1.msra.mxu0 0.0
    %749 = vmatprep.subr.mxu0 0.0
    %750 = vmatpush1.msra.mxu0 0.0
    %751 = vmatprep.subr.mxu0 0.0
    %752 = vmatpush1.msra.mxu0 0.0
    %753 = vmatprep.subr.mxu0 0.0
    %754 = vmatpush1.msra.mxu0 0.0
    %755 = vmatprep.subr.mxu0 0.0
    %756 = vmatpush1.msra.mxu0 0.0
    %757 = vmatprep.mubr.f32.mxu0 0.0
    %758 = vmatmul.mubr.f32.gmra.mrb[0].mxu0 %v613
    %v759 = vpop.f32.mrb[0].mxu0
    %v760 = vadd.f32 0.0, %v759
    %v761 = vpop.f32.mrb[0].mxu0
    %v762 = vadd.f32 0.0, %v761
    %763 = vdwg.mxu0
    %v764 = vadd.f32 %v618, %v689
    %v765 = vadd.f32 %v619, %v691
    %v766 = vadd.f32 %v620, %v760
    %v767 = vadd.f32 %v621, %v762
    %v768 = vxor.u32 %v764, 2147483648
    %v769 = vmul.f32 %v768, 1.442695
    %v770 = vpow.pop %v769
    %v771 = vadd.f32 %v770, 1.0
    %v772 = vrcp.pop %v771
    %v773 = vmul.f32 1.0, %v772
    %v774 = vxor.u32 %v765, 2147483648
    %v775 = vmul.f32 %v774, 1.442695
    %v776 = vpow.pop %v775
    %v777 = vadd.f32 %v776, 1.0
    %v778 = vrcp.pop %v777
    %v779 = vmul.f32 1.0, %v778
    %v780 = vtanh.pop %v766
    %v781 = vxor.u32 %v767, 2147483648
    %v782 = vmul.f32 %v781, 1.442695
    %v783 = vpow.pop %v782
    %v784 = vadd.f32 %v783, 1.0
    %v785 = vrcp.pop %v784
    %v786 = vmul.f32 1.0, %v785
    %v787 = vmul.f32 %v779, %v611
    %v788 = vmul.f32 %v773, %v780
    %v789 = vadd.f32 %v787, %v788
    %v790 = vtanh.pop %v789
    %v791 = vmul.f32 %v786, %v790
    %s792 = scalar_lea.vmem [#allocation8], 8
    %793 = vst [vmem:[%s792] sm:$0xff] %v791
    %s794 = smul.u32 2, 4
    %s795 = smul.addr %s794, 8
    %s796 = scalar_lea.vmem [#allocation4], %s795
    %v797 = vld [vmem:[%s796] sm:$0xff]
    %v798 = vld [vmem:[%s796 + $0x8] sm:$0xff]
    %v799 = vld [vmem:[%s796 + $0x10] sm:$0xff]
    %v800 = vld [vmem:[%s796 + $0x18] sm:$0xff]
    %801 = vmatprep.subr.mxu0 %v372
    %802 = vmatpush1.msra.mxu0 %v371
    %803 = vmatprep.subr.mxu0 %v376
    %804 = vmatpush1.msra.mxu0 %v375
    %805 = vmatprep.subr.mxu0 %v380
    %806 = vmatpush1.msra.mxu0 %v379
    %807 = vmatprep.subr.mxu0 %v384
    %808 = vmatpush1.msra.mxu0 %v383
    %809 = vmatprep.subr.mxu0 %v388
    %810 = vmatpush1.msra.mxu0 %v387
    %811 = vmatprep.subr.mxu0 %v392
    %812 = vmatpush1.msra.mxu0 %v391
    %813 = vmatprep.subr.mxu0 %v396
    %814 = vmatpush1.msra.mxu0 %v395
    %815 = vmatprep.subr.mxu0 %v400
    %816 = vmatpush1.msra.mxu0 %v399
    %817 = vmatprep.subr.mxu0 %v404
    %818 = vmatpush1.msra.mxu0 %v403
    %819 = vmatprep.subr.mxu0 %v408
    %820 = vmatpush1.msra.mxu0 %v407
    %821 = vmatprep.subr.mxu0 %v412
    %822 = vmatpush1.msra.mxu0 %v411
    %823 = vmatprep.subr.mxu0 %v416
    %824 = vmatpush1.msra.mxu0 %v415
    %825 = vmatprep.subr.mxu0 %v420
    %826 = vmatpush1.msra.mxu0 %v419
    %827 = vmatprep.subr.mxu0 %v424
    %828 = vmatpush1.msra.mxu0 %v423
    %829 = vmatprep.subr.mxu0 %v428
    %830 = vmatpush1.msra.mxu0 %v427
    %831 = vmatprep.subr.mxu0 %v432
    %832 = vmatpush1.msra.mxu0 %v431
    %833 = vmatprep.subr.mxu0 0.0
    %834 = vmatpush1.msra.mxu0 0.0
    %835 = vmatprep.subr.mxu0 0.0
    %836 = vmatpush1.msra.mxu0 0.0
    %837 = vmatprep.subr.mxu0 0.0
    %838 = vmatpush1.msra.mxu0 0.0
    %839 = vmatprep.subr.mxu0 0.0
    %840 = vmatpush1.msra.mxu0 0.0
    %841 = vmatprep.subr.mxu0 0.0
    %842 = vmatpush1.msra.mxu0 0.0
    %843 = vmatprep.subr.mxu0 0.0
    %844 = vmatpush1.msra.mxu0 0.0
    %845 = vmatprep.subr.mxu0 0.0
    %846 = vmatpush1.msra.mxu0 0.0
    %847 = vmatprep.subr.mxu0 0.0
    %848 = vmatpush1.msra.mxu0 0.0
    %849 = vmatprep.subr.mxu0 0.0
    %850 = vmatpush1.msra.mxu0 0.0
    %851 = vmatprep.subr.mxu0 0.0
    %852 = vmatpush1.msra.mxu0 0.0
    %853 = vmatprep.subr.mxu0 0.0
    %854 = vmatpush1.msra.mxu0 0.0
    %855 = vmatprep.subr.mxu0 0.0
    %856 = vmatpush1.msra.mxu0 0.0
    %857 = vmatprep.subr.mxu0 0.0
    %858 = vmatpush1.msra.mxu0 0.0
    %859 = vmatprep.subr.mxu0 0.0
    %860 = vmatpush1.msra.mxu0 0.0
    %861 = vmatprep.subr.mxu0 0.0
    %862 = vmatpush1.msra.mxu0 0.0
    %863 = vmatprep.subr.mxu0 0.0
    %864 = vmatpush1.msra.mxu0 0.0
    %865 = vmatprep.mubr.f32.mxu0 0.0
    %866 = vmatmul.mubr.f32.gmra.mrb[0].mxu0 %v791
    %v867 = vpop.f32.mrb[0].mxu0
    %v868 = vadd.f32 0.0, %v867
    %v869 = vpop.f32.mrb[0].mxu0
    %v870 = vadd.f32 0.0, %v869
    %871 = vdwg.mxu0
    %872 = vmatprep.subr.mxu0 %v374
    %873 = vmatpush1.msra.mxu0 %v373
    %874 = vmatprep.subr.mxu0 %v378
    %875 = vmatpush1.msra.mxu0 %v377
    %876 = vmatprep.subr.mxu0 %v382
    %877 = vmatpush1.msra.mxu0 %v381
    %878 = vmatprep.subr.mxu0 %v386
    %879 = vmatpush1.msra.mxu0 %v385
    %880 = vmatprep.subr.mxu0 %v390
    %881 = vmatpush1.msra.mxu0 %v389
    %882 = vmatprep.subr.mxu0 %v394
    %883 = vmatpush1.msra.mxu0 %v393
    %884 = vmatprep.subr.mxu0 %v398
    %885 = vmatpush1.msra.mxu0 %v397
    %886 = vmatprep.subr.mxu0 %v402
    %887 = vmatpush1.msra.mxu0 %v401
    %888 = vmatprep.subr.mxu0 %v406
    %889 = vmatpush1.msra.mxu0 %v405
    %890 = vmatprep.subr.mxu0 %v410
    %891 = vmatpush1.msra.mxu0 %v409
    %892 = vmatprep.subr.mxu0 %v414
    %893 = vmatpush1.msra.mxu0 %v413
    %894 = vmatprep.subr.mxu0 %v418
    %895 = vmatpush1.msra.mxu0 %v417
    %896 = vmatprep.subr.mxu0 %v422
    %897 = vmatpush1.msra.mxu0 %v421
    %898 = vmatprep.subr.mxu0 %v426
    %899 = vmatpush1.msra.mxu0 %v425
    %900 = vmatprep.subr.mxu0 %v430
    %901 = vmatpush1.msra.mxu0 %v429
    %902 = vmatprep.subr.mxu0 %v434
    %903 = vmatpush1.msra.mxu0 %v433
    %904 = vmatprep.subr.mxu0 0.0
    %905 = vmatpush1.msra.mxu0 0.0
    %906 = vmatprep.subr.mxu0 0.0
    %907 = vmatpush1.msra.mxu0 0.0
    %908 = vmatprep.subr.mxu0 0.0
    %909 = vmatpush1.msra.mxu0 0.0
    %910 = vmatprep.subr.mxu0 0.0
    %911 = vmatpush1.msra.mxu0 0.0
    %912 = vmatprep.subr.mxu0 0.0
    %913 = vmatpush1.msra.mxu0 0.0
    %914 = vmatprep.subr.mxu0 0.0
    %915 = vmatpush1.msra.mxu0 0.0
    %916 = vmatprep.subr.mxu0 0.0
    %917 = vmatpush1.msra.mxu0 0.0
    %918 = vmatprep.subr.mxu0 0.0
    %919 = vmatpush1.msra.mxu0 0.0
    %920 = vmatprep.subr.mxu0 0.0
    %921 = vmatpush1.msra.mxu0 0.0
    %922 = vmatprep.subr.mxu0 0.0
    %923 = vmatpush1.msra.mxu0 0.0
    %924 = vmatprep.subr.mxu0 0.0
    %925 = vmatpush1.msra.mxu0 0.0
    %926 = vmatprep.subr.mxu0 0.0
    %927 = vmatpush1.msra.mxu0 0.0
    %928 = vmatprep.subr.mxu0 0.0
    %929 = vmatpush1.msra.mxu0 0.0
    %930 = vmatprep.subr.mxu0 0.0
    %931 = vmatpush1.msra.mxu0 0.0
    %932 = vmatprep.subr.mxu0 0.0
    %933 = vmatpush1.msra.mxu0 0.0
    %934 = vmatprep.subr.mxu0 0.0
    %935 = vmatpush1.msra.mxu0 0.0
    %936 = vmatprep.mubr.f32.mxu0 0.0
    %937 = vmatmul.mubr.f32.gmra.mrb[0].mxu0 %v791
    %v938 = vpop.f32.mrb[0].mxu0
    %v939 = vadd.f32 0.0, %v938
    %v940 = vpop.f32.mrb[0].mxu0
    %v941 = vadd.f32 0.0, %v940
    %942 = vdwg.mxu0
    %v943 = vadd.f32 %v797, %v868
    %v944 = vadd.f32 %v798, %v870
    %v945 = vadd.f32 %v799, %v939
    %v946 = vadd.f32 %v800, %v941
    %v947 = vxor.u32 %v943, 2147483648
    %v948 = vmul.f32 %v947, 1.442695
    %v949 = vpow.pop %v948
    %v950 = vadd.f32 %v949, 1.0
    %v951 = vrcp.pop %v950
    %v952 = vmul.f32 1.0, %v951
    %v953 = vxor.u32 %v944, 2147483648
    %v954 = vmul.f32 %v953, 1.442695
    %v955 = vpow.pop %v954
    %v956 = vadd.f32 %v955, 1.0
    %v957 = vrcp.pop %v956
    %v958 = vmul.f32 1.0, %v957
    %v959 = vtanh.pop %v945
    %v960 = vxor.u32 %v946, 2147483648
    %v961 = vmul.f32 %v960, 1.442695
    %v962 = vpow.pop %v961
    %v963 = vadd.f32 %v962, 1.0
    %v964 = vrcp.pop %v963
    %v965 = vmul.f32 1.0, %v964
    %v966 = vmul.f32 %v958, %v789
    %v967 = vmul.f32 %v952, %v959
    %v968 = vadd.f32 %v966, %v967
    %v969 = vtanh.pop %v968
    %v970 = vmul.f32 %v965, %v969
    %s971 = scalar_lea.vmem [#allocation8], 16
    %972 = vst [vmem:[%s971] sm:$0xff] %v970
    %s973 = smul.u32 3, 4
    %s974 = smul.addr %s973, 8
    %s975 = scalar_lea.vmem [#allocation4], %s974
    %v976 = vld [vmem:[%s975] sm:$0xff]
    %v977 = vld [vmem:[%s975 + $0x8] sm:$0xff]
    %v978 = vld [vmem:[%s975 + $0x10] sm:$0xff]
    %v979 = vld [vmem:[%s975 + $0x18] sm:$0xff]
    %980 = vmatprep.subr.mxu0 %v372
    %981 = vmatpush1.msra.mxu0 %v371
    %982 = vmatprep.subr.mxu0 %v376
    %983 = vmatpush1.msra.mxu0 %v375
    %984 = vmatprep.subr.mxu0 %v380
    %985 = vmatpush1.msra.mxu0 %v379
    %986 = vmatprep.subr.mxu0 %v384
    %987 = vmatpush1.msra.mxu0 %v383
    %988 = vmatprep.subr.mxu0 %v388
    %989 = vmatpush1.msra.mxu0 %v387
    %990 = vmatprep.subr.mxu0 %v392
    %991 = vmatpush1.msra.mxu0 %v391
    %992 = vmatprep.subr.mxu0 %v396
    %993 = vmatpush1.msra.mxu0 %v395
    %994 = vmatprep.subr.mxu0 %v400
    %995 = vmatpush1.msra.mxu0 %v399
    %996 = vmatprep.subr.mxu0 %v404
    %997 = vmatpush1.msra.mxu0 %v403
    %998 = vmatprep.subr.mxu0 %v408
    %999 = vmatpush1.msra.mxu0 %v407
    %1000 = vmatprep.subr.mxu0 %v412
    %1001 = vmatpush1.msra.mxu0 %v411
    %1002 = vmatprep.subr.mxu0 %v416
    %1003 = vmatpush1.msra.mxu0 %v415
    %1004 = vmatprep.subr.mxu0 %v420
    %1005 = vmatpush1.msra.mxu0 %v419
    %1006 = vmatprep.subr.mxu0 %v424
    %1007 = vmatpush1.msra.mxu0 %v423
    %1008 = vmatprep.subr.mxu0 %v428
    %1009 = vmatpush1.msra.mxu0 %v427
    %1010 = vmatprep.subr.mxu0 %v432
    %1011 = vmatpush1.msra.mxu0 %v431
    %1012 = vmatprep.subr.mxu0 0.0
    %1013 = vmatpush1.msra.mxu0 0.0
    %1014 = vmatprep.subr.mxu0 0.0
    %1015 = vmatpush1.msra.mxu0 0.0
    %1016 = vmatprep.subr.mxu0 0.0
    %1017 = vmatpush1.msra.mxu0 0.0
    %1018 = vmatprep.subr.mxu0 0.0
    %1019 = vmatpush1.msra.mxu0 0.0
    %1020 = vmatprep.subr.mxu0 0.0
    %1021 = vmatpush1.msra.mxu0 0.0
    %1022 = vmatprep.subr.mxu0 0.0
    %1023 = vmatpush1.msra.mxu0 0.0
    %1024 = vmatprep.subr.mxu0 0.0
    %1025 = vmatpush1.msra.mxu0 0.0
    %1026 = vmatprep.subr.mxu0 0.0
    %1027 = vmatpush1.msra.mxu0 0.0
    %1028 = vmatprep.subr.mxu0 0.0
    %1029 = vmatpush1.msra.mxu0 0.0
    %1030 = vmatprep.subr.mxu0 0.0
    %1031 = vmatpush1.msra.mxu0 0.0
    %1032 = vmatprep.subr.mxu0 0.0
    %1033 = vmatpush1.msra.mxu0 0.0
    %1034 = vmatprep.subr.mxu0 0.0
    %1035 = vmatpush1.msra.mxu0 0.0
    %1036 = vmatprep.subr.mxu0 0.0
    %1037 = vmatpush1.msra.mxu0 0.0
    %1038 = vmatprep.subr.mxu0 0.0
    %1039 = vmatpush1.msra.mxu0 0.0
    %1040 = vmatprep.subr.mxu0 0.0
    %1041 = vmatpush1.msra.mxu0 0.0
    %1042 = vmatprep.subr.mxu0 0.0
    %1043 = vmatpush1.msra.mxu0 0.0
    %1044 = vmatprep.mubr.f32.mxu0 0.0
    %1045 = vmatmul.mubr.f32.gmra.mrb[0].mxu0 %v970
    %v1046 = vpop.f32.mrb[0].mxu0
    %v1047 = vadd.f32 0.0, %v1046
    %v1048 = vpop.f32.mrb[0].mxu0
    %v1049 = vadd.f32 0.0, %v1048
    %1050 = vdwg.mxu0
    %1051 = vmatprep.subr.mxu0 %v374
    %1052 = vmatpush1.msra.mxu0 %v373
    %1053 = vmatprep.subr.mxu0 %v378
    %1054 = vmatpush1.msra.mxu0 %v377
    %1055 = vmatprep.subr.mxu0 %v382
    %1056 = vmatpush1.msra.mxu0 %v381
    %1057 = vmatprep.subr.mxu0 %v386
    %1058 = vmatpush1.msra.mxu0 %v385
    %1059 = vmatprep.subr.mxu0 %v390
    %1060 = vmatpush1.msra.mxu0 %v389
    %1061 = vmatprep.subr.mxu0 %v394
    %1062 = vmatpush1.msra.mxu0 %v393
    %1063 = vmatprep.subr.mxu0 %v398
    %1064 = vmatpush1.msra.mxu0 %v397
    %1065 = vmatprep.subr.mxu0 %v402
    %1066 = vmatpush1.msra.mxu0 %v401
    %1067 = vmatprep.subr.mxu0 %v406
    %1068 = vmatpush1.msra.mxu0 %v405
    %1069 = vmatprep.subr.mxu0 %v410
    %1070 = vmatpush1.msra.mxu0 %v409
    %1071 = vmatprep.subr.mxu0 %v414
    %1072 = vmatpush1.msra.mxu0 %v413
    %1073 = vmatprep.subr.mxu0 %v418
    %1074 = vmatpush1.msra.mxu0 %v417
    %1075 = vmatprep.subr.mxu0 %v422
    %1076 = vmatpush1.msra.mxu0 %v421
    %1077 = vmatprep.subr.mxu0 %v426
    %1078 = vmatpush1.msra.mxu0 %v425
    %1079 = vmatprep.subr.mxu0 %v430
    %1080 = vmatpush1.msra.mxu0 %v429
    %1081 = vmatprep.subr.mxu0 %v434
    %1082 = vmatpush1.msra.mxu0 %v433
    %1083 = vmatprep.subr.mxu0 0.0
    %1084 = vmatpush1.msra.mxu0 0.0
    %1085 = vmatprep.subr.mxu0 0.0
    %1086 = vmatpush1.msra.mxu0 0.0
    %1087 = vmatprep.subr.mxu0 0.0
    %1088 = vmatpush1.msra.mxu0 0.0
    %1089 = vmatprep.subr.mxu0 0.0
    %1090 = vmatpush1.msra.mxu0 0.0
    %1091 = vmatprep.subr.mxu0 0.0
    %1092 = vmatpush1.msra.mxu0 0.0
    %1093 = vmatprep.subr.mxu0 0.0
    %1094 = vmatpush1.msra.mxu0 0.0
    %1095 = vmatprep.subr.mxu0 0.0
    %1096 = vmatpush1.msra.mxu0 0.0
    %1097 = vmatprep.subr.mxu0 0.0
    %1098 = vmatpush1.msra.mxu0 0.0
    %1099 = vmatprep.subr.mxu0 0.0
    %1100 = vmatpush1.msra.mxu0 0.0
    %1101 = vmatprep.subr.mxu0 0.0
    %1102 = vmatpush1.msra.mxu0 0.0
    %1103 = vmatprep.subr.mxu0 0.0
    %1104 = vmatpush1.msra.mxu0 0.0
    %1105 = vmatprep.subr.mxu0 0.0
    %1106 = vmatpush1.msra.mxu0 0.0
    %1107 = vmatprep.subr.mxu0 0.0
    %1108 = vmatpush1.msra.mxu0 0.0
    %1109 = vmatprep.subr.mxu0 0.0
    %1110 = vmatpush1.msra.mxu0 0.0
    %1111 = vmatprep.subr.mxu0 0.0
    %1112 = vmatpush1.msra.mxu0 0.0
    %1113 = vmatprep.subr.mxu0 0.0
    %1114 = vmatpush1.msra.mxu0 0.0
    %1115 = vmatprep.mubr.f32.mxu0 0.0
    %1116 = vmatmul.mubr.f32.gmra.mrb[0].mxu0 %v970
    %v1117 = vpop.f32.mrb[0].mxu0
    %v1118 = vadd.f32 0.0, %v1117
    %v1119 = vpop.f32.mrb[0].mxu0
    %v1120 = vadd.f32 0.0, %v1119
    %1121 = vdwg.mxu0
    %v1122 = vadd.f32 %v976, %v1047
    %v1123 = vadd.f32 %v977, %v1049
    %v1124 = vadd.f32 %v978, %v1118
    %v1125 = vadd.f32 %v979, %v1120
    %v1126 = vxor.u32 %v1122, 2147483648
    %v1127 = vmul.f32 %v1126, 1.442695
    %v1128 = vpow.pop %v1127
    %v1129 = vadd.f32 %v1128, 1.0
    %v1130 = vrcp.pop %v1129
    %v1131 = vmul.f32 1.0, %v1130
    %v1132 = vxor.u32 %v1123, 2147483648
    %v1133 = vmul.f32 %v1132, 1.442695
    %v1134 = vpow.pop %v1133
    %v1135 = vadd.f32 %v1134, 1.0
    %v1136 = vrcp.pop %v1135
    %v1137 = vmul.f32 1.0, %v1136
    %v1138 = vtanh.pop %v1124
    %v1139 = vxor.u32 %v1125, 2147483648
    %v1140 = vmul.f32 %v1139, 1.442695
    %v1141 = vpow.pop %v1140
    %v1142 = vadd.f32 %v1141, 1.0
    %v1143 = vrcp.pop %v1142
    %v1144 = vmul.f32 1.0, %v1143
    %v1145 = vmul.f32 %v1137, %v968
    %v1146 = vmul.f32 %v1131, %v1138
    %v1147 = vadd.f32 %v1145, %v1146
    %v1148 = vtanh.pop %v1147
    %v1149 = vmul.f32 %v1144, %v1148
    %s1150 = scalar_lea.vmem [#allocation8], 24
    %1151 = vst [vmem:[%s1150] sm:$0xff] %v1149
    %s1152 = smul.u32 4, 4
    %s1153 = smul.addr %s1152, 8
    %s1154 = scalar_lea.vmem [#allocation4], %s1153
    %v1155 = vld [vmem:[%s1154] sm:$0xff]
    %v1156 = vld [vmem:[%s1154 + $0x8] sm:$0xff]
    %v1157 = vld [vmem:[%s1154 + $0x10] sm:$0xff]
    %v1158 = vld [vmem:[%s1154 + $0x18] sm:$0xff]
    %1159 = vmatprep.subr.mxu0 %v372
    %1160 = vmatpush1.msra.mxu0 %v371
    %1161 = vmatprep.subr.mxu0 %v376
    %1162 = vmatpush1.msra.mxu0 %v375
    %1163 = vmatprep.subr.mxu0 %v380
    %1164 = vmatpush1.msra.mxu0 %v379
    %1165 = vmatprep.subr.mxu0 %v384
    %1166 = vmatpush1.msra.mxu0 %v383
    %1167 = vmatprep.subr.mxu0 %v388
    %1168 = vmatpush1.msra.mxu0 %v387
    %1169 = vmatprep.subr.mxu0 %v392
    %1170 = vmatpush1.msra.mxu0 %v391
    %1171 = vmatprep.subr.mxu0 %v396
    %1172 = vmatpush1.msra.mxu0 %v395
    %1173 = vmatprep.subr.mxu0 %v400
    %1174 = vmatpush1.msra.mxu0 %v399
    %1175 = vmatprep.subr.mxu0 %v404
    %1176 = vmatpush1.msra.mxu0 %v403
    %1177 = vmatprep.subr.mxu0 %v408
    %1178 = vmatpush1.msra.mxu0 %v407
    %1179 = vmatprep.subr.mxu0 %v412
    %1180 = vmatpush1.msra.mxu0 %v411
    %1181 = vmatprep.subr.mxu0 %v416
    %1182 = vmatpush1.msra.mxu0 %v415
    %1183 = vmatprep.subr.mxu0 %v420
    %1184 = vmatpush1.msra.mxu0 %v419
    %1185 = vmatprep.subr.mxu0 %v424
    %1186 = vmatpush1.msra.mxu0 %v423
    %1187 = vmatprep.subr.mxu0 %v428
    %1188 = vmatpush1.msra.mxu0 %v427
    %1189 = vmatprep.subr.mxu0 %v432
    %1190 = vmatpush1.msra.mxu0 %v431
    %1191 = vmatprep.subr.mxu0 0.0
    %1192 = vmatpush1.msra.mxu0 0.0
    %1193 = vmatprep.subr.mxu0 0.0
    %1194 = vmatpush1.msra.mxu0 0.0
    %1195 = vmatprep.subr.mxu0 0.0
    %1196 = vmatpush1.msra.mxu0 0.0
    %1197 = vmatprep.subr.mxu0 0.0
    %1198 = vmatpush1.msra.mxu0 0.0
    %1199 = vmatprep.subr.mxu0 0.0
    %1200 = vmatpush1.msra.mxu0 0.0
    %1201 = vmatprep.subr.mxu0 0.0
    %1202 = vmatpush1.msra.mxu0 0.0
    %1203 = vmatprep.subr.mxu0 0.0
    %1204 = vmatpush1.msra.mxu0 0.0
    %1205 = vmatprep.subr.mxu0 0.0
    %1206 = vmatpush1.msra.mxu0 0.0
    %1207 = vmatprep.subr.mxu0 0.0
    %1208 = vmatpush1.msra.mxu0 0.0
    %1209 = vmatprep.subr.mxu0 0.0
    %1210 = vmatpush1.msra.mxu0 0.0
    %1211 = vmatprep.subr.mxu0 0.0
    %1212 = vmatpush1.msra.mxu0 0.0
    %1213 = vmatprep.subr.mxu0 0.0
    %1214 = vmatpush1.msra.mxu0 0.0
    %1215 = vmatprep.subr.mxu0 0.0
    %1216 = vmatpush1.msra.mxu0 0.0
    %1217 = vmatprep.subr.mxu0 0.0
    %1218 = vmatpush1.msra.mxu0 0.0
    %1219 = vmatprep.subr.mxu0 0.0
    %1220 = vmatpush1.msra.mxu0 0.0
    %1221 = vmatprep.subr.mxu0 0.0
    %1222 = vmatpush1.msra.mxu0 0.0
    %1223 = vmatprep.mubr.f32.mxu0 0.0
    %1224 = vmatmul.mubr.f32.gmra.mrb[0].mxu0 %v1149
    %v1225 = vpop.f32.mrb[0].mxu0
    %v1226 = vadd.f32 0.0, %v1225
    %v1227 = vpop.f32.mrb[0].mxu0
    %v1228 = vadd.f32 0.0, %v1227
    %1229 = vdwg.mxu0
    %1230 = vmatprep.subr.mxu0 %v374
    %1231 = vmatpush1.msra.mxu0 %v373
    %1232 = vmatprep.subr.mxu0 %v378
    %1233 = vmatpush1.msra.mxu0 %v377
    %1234 = vmatprep.subr.mxu0 %v382
    %1235 = vmatpush1.msra.mxu0 %v381
    %1236 = vmatprep.subr.mxu0 %v386
    %1237 = vmatpush1.msra.mxu0 %v385
    %1238 = vmatprep.subr.mxu0 %v390
    %1239 = vmatpush1.msra.mxu0 %v389
    %1240 = vmatprep.subr.mxu0 %v394
    %1241 = vmatpush1.msra.mxu0 %v393
    %1242 = vmatprep.subr.mxu0 %v398
    %1243 = vmatpush1.msra.mxu0 %v397
    %1244 = vmatprep.subr.mxu0 %v402
    %1245 = vmatpush1.msra.mxu0 %v401
    %1246 = vmatprep.subr.mxu0 %v406
    %1247 = vmatpush1.msra.mxu0 %v405
    %1248 = vmatprep.subr.mxu0 %v410
    %1249 = vmatpush1.msra.mxu0 %v409
    %1250 = vmatprep.subr.mxu0 %v414
    %1251 = vmatpush1.msra.mxu0 %v413
    %1252 = vmatprep.subr.mxu0 %v418
    %1253 = vmatpush1.msra.mxu0 %v417
    %1254 = vmatprep.subr.mxu0 %v422
    %1255 = vmatpush1.msra.mxu0 %v421
    %1256 = vmatprep.subr.mxu0 %v426
    %1257 = vmatpush1.msra.mxu0 %v425
    %1258 = vmatprep.subr.mxu0 %v430
    %1259 = vmatpush1.msra.mxu0 %v429
    %1260 = vmatprep.subr.mxu0 %v434
    %1261 = vmatpush1.msra.mxu0 %v433
    %1262 = vmatprep.subr.mxu0 0.0
    %1263 = vmatpush1.msra.mxu0 0.0
    %1264 = vmatprep.subr.mxu0 0.0
    %1265 = vmatpush1.msra.mxu0 0.0
    %1266 = vmatprep.subr.mxu0 0.0
    %1267 = vmatpush1.msra.mxu0 0.0
    %1268 = vmatprep.subr.mxu0 0.0
    %1269 = vmatpush1.msra.mxu0 0.0
    %1270 = vmatprep.subr.mxu0 0.0
    %1271 = vmatpush1.msra.mxu0 0.0
    %1272 = vmatprep.subr.mxu0 0.0
    %1273 = vmatpush1.msra.mxu0 0.0
    %1274 = vmatprep.subr.mxu0 0.0
    %1275 = vmatpush1.msra.mxu0 0.0
    %1276 = vmatprep.subr.mxu0 0.0
    %1277 = vmatpush1.msra.mxu0 0.0
    %1278 = vmatprep.subr.mxu0 0.0
    %1279 = vmatpush1.msra.mxu0 0.0
    %1280 = vmatprep.subr.mxu0 0.0
    %1281 = vmatpush1.msra.mxu0 0.0
    %1282 = vmatprep.subr.mxu0 0.0
    %1283 = vmatpush1.msra.mxu0 0.0
    %1284 = vmatprep.subr.mxu0 0.0
    %1285 = vmatpush1.msra.mxu0 0.0
    %1286 = vmatprep.subr.mxu0 0.0
    %1287 = vmatpush1.msra.mxu0 0.0
    %1288 = vmatprep.subr.mxu0 0.0
    %1289 = vmatpush1.msra.mxu0 0.0
    %1290 = vmatprep.subr.mxu0 0.0
    %1291 = vmatpush1.msra.mxu0 0.0
    %1292 = vmatprep.subr.mxu0 0.0
    %1293 = vmatpush1.msra.mxu0 0.0
    %1294 = vmatprep.mubr.f32.mxu0 0.0
    %1295 = vmatmul.mubr.f32.gmra.mrb[0].mxu0 %v1149
    %v1296 = vpop.f32.mrb[0].mxu0
    %v1297 = vadd.f32 0.0, %v1296
    %v1298 = vpop.f32.mrb[0].mxu0
    %v1299 = vadd.f32 0.0, %v1298
    %1300 = vdwg.mxu0
    %v1301 = vadd.f32 %v1155, %v1226
    %v1302 = vadd.f32 %v1156, %v1228
    %v1303 = vadd.f32 %v1157, %v1297
    %v1304 = vadd.f32 %v1158, %v1299
    %v1305 = vxor.u32 %v1301, 2147483648
    %v1306 = vmul.f32 %v1305, 1.442695
    %v1307 = vpow.pop %v1306
    %v1308 = vadd.f32 %v1307, 1.0
    %v1309 = vrcp.pop %v1308
    %v1310 = vmul.f32 1.0, %v1309
    %v1311 = vxor.u32 %v1302, 2147483648
    %v1312 = vmul.f32 %v1311, 1.442695
    %v1313 = vpow.pop %v1312
    %v1314 = vadd.f32 %v1313, 1.0
    %v1315 = vrcp.pop %v1314
    %v1316 = vmul.f32 1.0, %v1315
    %v1317 = vtanh.pop %v1303
    %v1318 = vxor.u32 %v1304, 2147483648
    %v1319 = vmul.f32 %v1318, 1.442695
    %v1320 = vpow.pop %v1319
    %v1321 = vadd.f32 %v1320, 1.0
    %v1322 = vrcp.pop %v1321
    %v1323 = vmul.f32 1.0, %v1322
    %v1324 = vmul.f32 %v1316, %v1147
    %v1325 = vmul.f32 %v1310, %v1317
    %v1326 = vadd.f32 %v1324, %v1325
    %v1327 = vtanh.pop %v1326
    %v1328 = vmul.f32 %v1323, %v1327
    %s1329 = scalar_lea.vmem [#allocation8], 32
    %1330 = vst [vmem:[%s1329] sm:$0xff] %v1328
    %s1331 = smul.u32 5, 4
    %s1332 = smul.addr %s1331, 8
    %s1333 = scalar_lea.vmem [#allocation4], %s1332
    %v1334 = vld [vmem:[%s1333] sm:$0xff]
    %v1335 = vld [vmem:[%s1333 + $0x8] sm:$0xff]
    %v1336 = vld [vmem:[%s1333 + $0x10] sm:$0xff]
    %v1337 = vld [vmem:[%s1333 + $0x18] sm:$0xff]
    %1338 = vmatprep.subr.mxu0 %v372
    %1339 = vmatpush1.msra.mxu0 %v371
    %1340 = vmatprep.subr.mxu0 %v376
    %1341 = vmatpush1.msra.mxu0 %v375
    %1342 = vmatprep.subr.mxu0 %v380
    %1343 = vmatpush1.msra.mxu0 %v379
    %1344 = vmatprep.subr.mxu0 %v384
    %1345 = vmatpush1.msra.mxu0 %v383
    %1346 = vmatprep.subr.mxu0 %v388
    %1347 = vmatpush1.msra.mxu0 %v387
    %1348 = vmatprep.subr.mxu0 %v392
    %1349 = vmatpush1.msra.mxu0 %v391
    %1350 = vmatprep.subr.mxu0 %v396
    %1351 = vmatpush1.msra.mxu0 %v395
    %1352 = vmatprep.subr.mxu0 %v400
    %1353 = vmatpush1.msra.mxu0 %v399
    %1354 = vmatprep.subr.mxu0 %v404
    %1355 = vmatpush1.msra.mxu0 %v403
    %1356 = vmatprep.subr.mxu0 %v408
    %1357 = vmatpush1.msra.mxu0 %v407
    %1358 = vmatprep.subr.mxu0 %v412
    %1359 = vmatpush1.msra.mxu0 %v411
    %1360 = vmatprep.subr.mxu0 %v416
    %1361 = vmatpush1.msra.mxu0 %v415
    %1362 = vmatprep.subr.mxu0 %v420
    %1363 = vmatpush1.msra.mxu0 %v419
    %1364 = vmatprep.subr.mxu0 %v424
    %1365 = vmatpush1.msra.mxu0 %v423
    %1366 = vmatprep.subr.mxu0 %v428
    %1367 = vmatpush1.msra.mxu0 %v427
    %1368 = vmatprep.subr.mxu0 %v432
    %1369 = vmatpush1.msra.mxu0 %v431
    %1370 = vmatprep.subr.mxu0 0.0
    %1371 = vmatpush1.msra.mxu0 0.0
    %1372 = vmatprep.subr.mxu0 0.0
    %1373 = vmatpush1.msra.mxu0 0.0
    %1374 = vmatprep.subr.mxu0 0.0
    %1375 = vmatpush1.msra.mxu0 0.0
    %1376 = vmatprep.subr.mxu0 0.0
    %1377 = vmatpush1.msra.mxu0 0.0
    %1378 = vmatprep.subr.mxu0 0.0
    %1379 = vmatpush1.msra.mxu0 0.0
    %1380 = vmatprep.subr.mxu0 0.0
    %1381 = vmatpush1.msra.mxu0 0.0
    %1382 = vmatprep.subr.mxu0 0.0
    %1383 = vmatpush1.msra.mxu0 0.0
    %1384 = vmatprep.subr.mxu0 0.0
    %1385 = vmatpush1.msra.mxu0 0.0
    %1386 = vmatprep.subr.mxu0 0.0
    %1387 = vmatpush1.msra.mxu0 0.0
    %1388 = vmatprep.subr.mxu0 0.0
    %1389 = vmatpush1.msra.mxu0 0.0
    %1390 = vmatprep.subr.mxu0 0.0
    %1391 = vmatpush1.msra.mxu0 0.0
    %1392 = vmatprep.subr.mxu0 0.0
    %1393 = vmatpush1.msra.mxu0 0.0
    %1394 = vmatprep.subr.mxu0 0.0
    %1395 = vmatpush1.msra.mxu0 0.0
    %1396 = vmatprep.subr.mxu0 0.0
    %1397 = vmatpush1.msra.mxu0 0.0
    %1398 = vmatprep.subr.mxu0 0.0
    %1399 = vmatpush1.msra.mxu0 0.0
    %1400 = vmatprep.subr.mxu0 0.0
    %1401 = vmatpush1.msra.mxu0 0.0
    %1402 = vmatprep.mubr.f32.mxu0 0.0
    %1403 = vmatmul.mubr.f32.gmra.mrb[0].mxu0 %v1328
    %v1404 = vpop.f32.mrb[0].mxu0
    %v1405 = vadd.f32 0.0, %v1404
    %v1406 = vpop.f32.mrb[0].mxu0
    %v1407 = vadd.f32 0.0, %v1406
    %1408 = vdwg.mxu0
    %1409 = vmatprep.subr.mxu0 %v374
    %1410 = vmatpush1.msra.mxu0 %v373
    %1411 = vmatprep.subr.mxu0 %v378
    %1412 = vmatpush1.msra.mxu0 %v377
    %1413 = vmatprep.subr.mxu0 %v382
    %1414 = vmatpush1.msra.mxu0 %v381
    %1415 = vmatprep.subr.mxu0 %v386
    %1416 = vmatpush1.msra.mxu0 %v385
    %1417 = vmatprep.subr.mxu0 %v390
    %1418 = vmatpush1.msra.mxu0 %v389
    %1419 = vmatprep.subr.mxu0 %v394
    %1420 = vmatpush1.msra.mxu0 %v393
    %1421 = vmatprep.subr.mxu0 %v398
    %1422 = vmatpush1.msra.mxu0 %v397
    %1423 = vmatprep.subr.mxu0 %v402
    %1424 = vmatpush1.msra.mxu0 %v401
    %1425 = vmatprep.subr.mxu0 %v406
    %1426 = vmatpush1.msra.mxu0 %v405
    %1427 = vmatprep.subr.mxu0 %v410
    %1428 = vmatpush1.msra.mxu0 %v409
    %1429 = vmatprep.subr.mxu0 %v414
    %1430 = vmatpush1.msra.mxu0 %v413
    %1431 = vmatprep.subr.mxu0 %v418
    %1432 = vmatpush1.msra.mxu0 %v417
    %1433 = vmatprep.subr.mxu0 %v422
    %1434 = vmatpush1.msra.mxu0 %v421
    %1435 = vmatprep.subr.mxu0 %v426
    %1436 = vmatpush1.msra.mxu0 %v425
    %1437 = vmatprep.subr.mxu0 %v430
    %1438 = vmatpush1.msra.mxu0 %v429
    %1439 = vmatprep.subr.mxu0 %v434
    %1440 = vmatpush1.msra.mxu0 %v433
    %1441 = vmatprep.subr.mxu0 0.0
    %1442 = vmatpush1.msra.mxu0 0.0
    %1443 = vmatprep.subr.mxu0 0.0
    %1444 = vmatpush1.msra.mxu0 0.0
    %1445 = vmatprep.subr.mxu0 0.0
    %1446 = vmatpush1.msra.mxu0 0.0
    %1447 = vmatprep.subr.mxu0 0.0
    %1448 = vmatpush1.msra.mxu0 0.0
    %1449 = vmatprep.subr.mxu0 0.0
    %1450 = vmatpush1.msra.mxu0 0.0
    %1451 = vmatprep.subr.mxu0 0.0
    %1452 = vmatpush1.msra.mxu0 0.0
    %1453 = vmatprep.subr.mxu0 0.0
    %1454 = vmatpush1.msra.mxu0 0.0
    %1455 = vmatprep.subr.mxu0 0.0
    %1456 = vmatpush1.msra.mxu0 0.0
    %1457 = vmatprep.subr.mxu0 0.0
    %1458 = vmatpush1.msra.mxu0 0.0
    %1459 = vmatprep.subr.mxu0 0.0
    %1460 = vmatpush1.msra.mxu0 0.0
    %1461 = vmatprep.subr.mxu0 0.0
    %1462 = vmatpush1.msra.mxu0 0.0
    %1463 = vmatprep.subr.mxu0 0.0
    %1464 = vmatpush1.msra.mxu0 0.0
    %1465 = vmatprep.subr.mxu0 0.0
    %1466 = vmatpush1.msra.mxu0 0.0
    %1467 = vmatprep.subr.mxu0 0.0
    %1468 = vmatpush1.msra.mxu0 0.0
    %1469 = vmatprep.subr.mxu0 0.0
    %1470 = vmatpush1.msra.mxu0 0.0
    %1471 = vmatprep.subr.mxu0 0.0
    %1472 = vmatpush1.msra.mxu0 0.0
    %1473 = vmatprep.mubr.f32.mxu0 0.0
    %1474 = vmatmul.mubr.f32.gmra.mrb[0].mxu0 %v1328
    %v1475 = vpop.f32.mrb[0].mxu0
    %v1476 = vadd.f32 0.0, %v1475
    %v1477 = vpop.f32.mrb[0].mxu0
    %v1478 = vadd.f32 0.0, %v1477
    %1479 = vdwg.mxu0
    %v1480 = vadd.f32 %v1334, %v1405
    %v1481 = vadd.f32 %v1335, %v1407
    %v1482 = vadd.f32 %v1336, %v1476
    %v1483 = vadd.f32 %v1337, %v1478
    %v1484 = vxor.u32 %v1480, 2147483648
    %v1485 = vmul.f32 %v1484, 1.442695
    %v1486 = vpow.pop %v1485
    %v1487 = vadd.f32 %v1486, 1.0
    %v1488 = vrcp.pop %v1487
    %v1489 = vmul.f32 1.0, %v1488
    %v1490 = vxor.u32 %v1481, 2147483648
    %v1491 = vmul.f32 %v1490, 1.442695
    %v1492 = vpow.pop %v1491
    %v1493 = vadd.f32 %v1492, 1.0
    %v1494 = vrcp.pop %v1493
    %v1495 = vmul.f32 1.0, %v1494
    %v1496 = vtanh.pop %v1482
    %v1497 = vxor.u32 %v1483, 2147483648
    %v1498 = vmul.f32 %v1497, 1.442695
    %v1499 = vpow.pop %v1498
    %v1500 = vadd.f32 %v1499, 1.0
    %v1501 = vrcp.pop %v1500
    %v1502 = vmul.f32 1.0, %v1501
    %v1503 = vmul.f32 %v1495, %v1326
    %v1504 = vmul.f32 %v1489, %v1496
    %v1505 = vadd.f32 %v1503, %v1504
    %v1506 = vtanh.pop %v1505
    %v1507 = vmul.f32 %v1502, %v1506
    %s1508 = scalar_lea.vmem [#allocation8], 40
    %1509 = vst [vmem:[%s1508] sm:$0xff] %v1507
    %s1510 = smul.u32 6, 4
    %s1511 = smul.addr %s1510, 8
    %s1512 = scalar_lea.vmem [#allocation4], %s1511
    %v1513 = vld [vmem:[%s1512] sm:$0xff]
    %v1514 = vld [vmem:[%s1512 + $0x8] sm:$0xff]
    %v1515 = vld [vmem:[%s1512 + $0x10] sm:$0xff]
    %v1516 = vld [vmem:[%s1512 + $0x18] sm:$0xff]
    %1517 = vmatprep.subr.mxu0 %v372
    %1518 = vmatpush1.msra.mxu0 %v371
    %1519 = vmatprep.subr.mxu0 %v376
    %1520 = vmatpush1.msra.mxu0 %v375
    %1521 = vmatprep.subr.mxu0 %v380
    %1522 = vmatpush1.msra.mxu0 %v379
    %1523 = vmatprep.subr.mxu0 %v384
    %1524 = vmatpush1.msra.mxu0 %v383
    %1525 = vmatprep.subr.mxu0 %v388
    %1526 = vmatpush1.msra.mxu0 %v387
    %1527 = vmatprep.subr.mxu0 %v392
    %1528 = vmatpush1.msra.mxu0 %v391
    %1529 = vmatprep.subr.mxu0 %v396
    %1530 = vmatpush1.msra.mxu0 %v395
    %1531 = vmatprep.subr.mxu0 %v400
    %1532 = vmatpush1.msra.mxu0 %v399
    %1533 = vmatprep.subr.mxu0 %v404
    %1534 = vmatpush1.msra.mxu0 %v403
    %1535 = vmatprep.subr.mxu0 %v408
    %1536 = vmatpush1.msra.mxu0 %v407
    %1537 = vmatprep.subr.mxu0 %v412
    %1538 = vmatpush1.msra.mxu0 %v411
    %1539 = vmatprep.subr.mxu0 %v416
    %1540 = vmatpush1.msra.mxu0 %v415
    %1541 = vmatprep.subr.mxu0 %v420
    %1542 = vmatpush1.msra.mxu0 %v419
    %1543 = vmatprep.subr.mxu0 %v424
    %1544 = vmatpush1.msra.mxu0 %v423
    %1545 = vmatprep.subr.mxu0 %v428
    %1546 = vmatpush1.msra.mxu0 %v427
    %1547 = vmatprep.subr.mxu0 %v432
    %1548 = vmatpush1.msra.mxu0 %v431
    %1549 = vmatprep.subr.mxu0 0.0
    %1550 = vmatpush1.msra.mxu0 0.0
    %1551 = vmatprep.subr.mxu0 0.0
    %1552 = vmatpush1.msra.mxu0 0.0
    %1553 = vmatprep.subr.mxu0 0.0
    %1554 = vmatpush1.msra.mxu0 0.0
    %1555 = vmatprep.subr.mxu0 0.0
    %1556 = vmatpush1.msra.mxu0 0.0
    %1557 = vmatprep.subr.mxu0 0.0
    %1558 = vmatpush1.msra.mxu0 0.0
    %1559 = vmatprep.subr.mxu0 0.0
    %1560 = vmatpush1.msra.mxu0 0.0
    %1561 = vmatprep.subr.mxu0 0.0
    %1562 = vmatpush1.msra.mxu0 0.0
    %1563 = vmatprep.subr.mxu0 0.0
    %1564 = vmatpush1.msra.mxu0 0.0
    %1565 = vmatprep.subr.mxu0 0.0
    %1566 = vmatpush1.msra.mxu0 0.0
    %1567 = vmatprep.subr.mxu0 0.0
    %1568 = vmatpush1.msra.mxu0 0.0
    %1569 = vmatprep.subr.mxu0 0.0
    %1570 = vmatpush1.msra.mxu0 0.0
    %1571 = vmatprep.subr.mxu0 0.0
    %1572 = vmatpush1.msra.mxu0 0.0
    %1573 = vmatprep.subr.mxu0 0.0
    %1574 = vmatpush1.msra.mxu0 0.0
    %1575 = vmatprep.subr.mxu0 0.0
    %1576 = vmatpush1.msra.mxu0 0.0
    %1577 = vmatprep.subr.mxu0 0.0
    %1578 = vmatpush1.msra.mxu0 0.0
    %1579 = vmatprep.subr.mxu0 0.0
    %1580 = vmatpush1.msra.mxu0 0.0
    %1581 = vmatprep.mubr.f32.mxu0 0.0
    %1582 = vmatmul.mubr.f32.gmra.mrb[0].mxu0 %v1507
    %v1583 = vpop.f32.mrb[0].mxu0
    %v1584 = vadd.f32 0.0, %v1583
    %v1585 = vpop.f32.mrb[0].mxu0
    %v1586 = vadd.f32 0.0, %v1585
    %1587 = vdwg.mxu0
    %1588 = vmatprep.subr.mxu0 %v374
    %1589 = vmatpush1.msra.mxu0 %v373
    %1590 = vmatprep.subr.mxu0 %v378
    %1591 = vmatpush1.msra.mxu0 %v377
    %1592 = vmatprep.subr.mxu0 %v382
    %1593 = vmatpush1.msra.mxu0 %v381
    %1594 = vmatprep.subr.mxu0 %v386
    %1595 = vmatpush1.msra.mxu0 %v385
    %1596 = vmatprep.subr.mxu0 %v390
    %1597 = vmatpush1.msra.mxu0 %v389
    %1598 = vmatprep.subr.mxu0 %v394
    %1599 = vmatpush1.msra.mxu0 %v393
    %1600 = vmatprep.subr.mxu0 %v398
    %1601 = vmatpush1.msra.mxu0 %v397
    %1602 = vmatprep.subr.mxu0 %v402
    %1603 = vmatpush1.msra.mxu0 %v401
    %1604 = vmatprep.subr.mxu0 %v406
    %1605 = vmatpush1.msra.mxu0 %v405
    %1606 = vmatprep.subr.mxu0 %v410
    %1607 = vmatpush1.msra.mxu0 %v409
    %1608 = vmatprep.subr.mxu0 %v414
    %1609 = vmatpush1.msra.mxu0 %v413
    %1610 = vmatprep.subr.mxu0 %v418
    %1611 = vmatpush1.msra.mxu0 %v417
    %1612 = vmatprep.subr.mxu0 %v422
    %1613 = vmatpush1.msra.mxu0 %v421
    %1614 = vmatprep.subr.mxu0 %v426
    %1615 = vmatpush1.msra.mxu0 %v425
    %1616 = vmatprep.subr.mxu0 %v430
    %1617 = vmatpush1.msra.mxu0 %v429
    %1618 = vmatprep.subr.mxu0 %v434
    %1619 = vmatpush1.msra.mxu0 %v433
    %1620 = vmatprep.subr.mxu0 0.0
    %1621 = vmatpush1.msra.mxu0 0.0
    %1622 = vmatprep.subr.mxu0 0.0
    %1623 = vmatpush1.msra.mxu0 0.0
    %1624 = vmatprep.subr.mxu0 0.0
    %1625 = vmatpush1.msra.mxu0 0.0
    %1626 = vmatprep.subr.mxu0 0.0
    %1627 = vmatpush1.msra.mxu0 0.0
    %1628 = vmatprep.subr.mxu0 0.0
    %1629 = vmatpush1.msra.mxu0 0.0
    %1630 = vmatprep.subr.mxu0 0.0
    %1631 = vmatpush1.msra.mxu0 0.0
    %1632 = vmatprep.subr.mxu0 0.0
    %1633 = vmatpush1.msra.mxu0 0.0
    %1634 = vmatprep.subr.mxu0 0.0
    %1635 = vmatpush1.msra.mxu0 0.0
    %1636 = vmatprep.subr.mxu0 0.0
    %1637 = vmatpush1.msra.mxu0 0.0
    %1638 = vmatprep.subr.mxu0 0.0
    %1639 = vmatpush1.msra.mxu0 0.0
    %1640 = vmatprep.subr.mxu0 0.0
    %1641 = vmatpush1.msra.mxu0 0.0
    %1642 = vmatprep.subr.mxu0 0.0
    %1643 = vmatpush1.msra.mxu0 0.0
    %1644 = vmatprep.subr.mxu0 0.0
    %1645 = vmatpush1.msra.mxu0 0.0
    %1646 = vmatprep.subr.mxu0 0.0
    %1647 = vmatpush1.msra.mxu0 0.0
    %1648 = vmatprep.subr.mxu0 0.0
    %1649 = vmatpush1.msra.mxu0 0.0
    %1650 = vmatprep.subr.mxu0 0.0
    %1651 = vmatpush1.msra.mxu0 0.0
    %1652 = vmatprep.mubr.f32.mxu0 0.0
    %1653 = vmatmul.mubr.f32.gmra.mrb[0].mxu0 %v1507
    %v1654 = vpop.f32.mrb[0].mxu0
    %v1655 = vadd.f32 0.0, %v1654
    %v1656 = vpop.f32.mrb[0].mxu0
    %v1657 = vadd.f32 0.0, %v1656
    %1658 = vdwg.mxu0
    %v1659 = vadd.f32 %v1513, %v1584
    %v1660 = vadd.f32 %v1514, %v1586
    %v1661 = vadd.f32 %v1515, %v1655
    %v1662 = vadd.f32 %v1516, %v1657
    %v1663 = vxor.u32 %v1659, 2147483648
    %v1664 = vmul.f32 %v1663, 1.442695
    %v1665 = vpow.pop %v1664
    %v1666 = vadd.f32 %v1665, 1.0
    %v1667 = vrcp.pop %v1666
    %v1668 = vmul.f32 1.0, %v1667
    %v1669 = vxor.u32 %v1660, 2147483648
    %v1670 = vmul.f32 %v1669, 1.442695
    %v1671 = vpow.pop %v1670
    %v1672 = vadd.f32 %v1671, 1.0
    %v1673 = vrcp.pop %v1672
    %v1674 = vmul.f32 1.0, %v1673
    %v1675 = vtanh.pop %v1661
    %v1676 = vxor.u32 %v1662, 2147483648
    %v1677 = vmul.f32 %v1676, 1.442695
    %v1678 = vpow.pop %v1677
    %v1679 = vadd.f32 %v1678, 1.0
    %v1680 = vrcp.pop %v1679
    %v1681 = vmul.f32 1.0, %v1680
    %v1682 = vmul.f32 %v1674, %v1505
    %v1683 = vmul.f32 %v1668, %v1675
    %v1684 = vadd.f32 %v1682, %v1683
    %v1685 = vtanh.pop %v1684
    %v1686 = vmul.f32 %v1681, %v1685
    %s1687 = scalar_lea.vmem [#allocation8], 48
    %1688 = vst [vmem:[%s1687] sm:$0xff] %v1686
    %s1689 = smul.u32 7, 4
    %s1690 = smul.addr %s1689, 8
    %s1691 = scalar_lea.vmem [#allocation4], %s1690
    %v1692 = vld [vmem:[%s1691] sm:$0xff]
    %v1693 = vld [vmem:[%s1691 + $0x8] sm:$0xff]
    %v1694 = vld [vmem:[%s1691 + $0x10] sm:$0xff]
    %v1695 = vld [vmem:[%s1691 + $0x18] sm:$0xff]
    %1696 = vmatprep.subr.mxu0 %v372
    %1697 = vmatpush1.msra.mxu0 %v371
    %1698 = vmatprep.subr.mxu0 %v376
    %1699 = vmatpush1.msra.mxu0 %v375
    %1700 = vmatprep.subr.mxu0 %v380
    %1701 = vmatpush1.msra.mxu0 %v379
    %1702 = vmatprep.subr.mxu0 %v384
    %1703 = vmatpush1.msra.mxu0 %v383
    %1704 = vmatprep.subr.mxu0 %v388
    %1705 = vmatpush1.msra.mxu0 %v387
    %1706 = vmatprep.subr.mxu0 %v392
    %1707 = vmatpush1.msra.mxu0 %v391
    %1708 = vmatprep.subr.mxu0 %v396
    %1709 = vmatpush1.msra.mxu0 %v395
    %1710 = vmatprep.subr.mxu0 %v400
    %1711 = vmatpush1.msra.mxu0 %v399
    %1712 = vmatprep.subr.mxu0 %v404
    %1713 = vmatpush1.msra.mxu0 %v403
    %1714 = vmatprep.subr.mxu0 %v408
    %1715 = vmatpush1.msra.mxu0 %v407
    %1716 = vmatprep.subr.mxu0 %v412
    %1717 = vmatpush1.msra.mxu0 %v411
    %1718 = vmatprep.subr.mxu0 %v416
    %1719 = vmatpush1.msra.mxu0 %v415
    %1720 = vmatprep.subr.mxu0 %v420
    %1721 = vmatpush1.msra.mxu0 %v419
    %1722 = vmatprep.subr.mxu0 %v424
    %1723 = vmatpush1.msra.mxu0 %v423
    %1724 = vmatprep.subr.mxu0 %v428
    %1725 = vmatpush1.msra.mxu0 %v427
    %1726 = vmatprep.subr.mxu0 %v432
    %1727 = vmatpush1.msra.mxu0 %v431
    %1728 = vmatprep.subr.mxu0 0.0
    %1729 = vmatpush1.msra.mxu0 0.0
    %1730 = vmatprep.subr.mxu0 0.0
    %1731 = vmatpush1.msra.mxu0 0.0
    %1732 = vmatprep.subr.mxu0 0.0
    %1733 = vmatpush1.msra.mxu0 0.0
    %1734 = vmatprep.subr.mxu0 0.0
    %1735 = vmatpush1.msra.mxu0 0.0
    %1736 = vmatprep.subr.mxu0 0.0
    %1737 = vmatpush1.msra.mxu0 0.0
    %1738 = vmatprep.subr.mxu0 0.0
    %1739 = vmatpush1.msra.mxu0 0.0
    %1740 = vmatprep.subr.mxu0 0.0
    %1741 = vmatpush1.msra.mxu0 0.0
    %1742 = vmatprep.subr.mxu0 0.0
    %1743 = vmatpush1.msra.mxu0 0.0
    %1744 = vmatprep.subr.mxu0 0.0
    %1745 = vmatpush1.msra.mxu0 0.0
    %1746 = vmatprep.subr.mxu0 0.0
    %1747 = vmatpush1.msra.mxu0 0.0
    %1748 = vmatprep.subr.mxu0 0.0
    %1749 = vmatpush1.msra.mxu0 0.0
    %1750 = vmatprep.subr.mxu0 0.0
    %1751 = vmatpush1.msra.mxu0 0.0
    %1752 = vmatprep.subr.mxu0 0.0
    %1753 = vmatpush1.msra.mxu0 0.0
    %1754 = vmatprep.subr.mxu0 0.0
    %1755 = vmatpush1.msra.mxu0 0.0
    %1756 = vmatprep.subr.mxu0 0.0
    %1757 = vmatpush1.msra.mxu0 0.0
    %1758 = vmatprep.subr.mxu0 0.0
    %1759 = vmatpush1.msra.mxu0 0.0
    %1760 = vmatprep.mubr.f32.mxu0 0.0
    %1761 = vmatmul.mubr.f32.gmra.mrb[0].mxu0 %v1686
    %v1762 = vpop.f32.mrb[0].mxu0
    %v1763 = vadd.f32 0.0, %v1762
    %v1764 = vpop.f32.mrb[0].mxu0
    %v1765 = vadd.f32 0.0, %v1764
    %1766 = vdwg.mxu0
    %1767 = vmatprep.subr.mxu0 %v374
    %1768 = vmatpush1.msra.mxu0 %v373
    %1769 = vmatprep.subr.mxu0 %v378
    %1770 = vmatpush1.msra.mxu0 %v377
    %1771 = vmatprep.subr.mxu0 %v382
    %1772 = vmatpush1.msra.mxu0 %v381
    %1773 = vmatprep.subr.mxu0 %v386
    %1774 = vmatpush1.msra.mxu0 %v385
    %1775 = vmatprep.subr.mxu0 %v390
    %1776 = vmatpush1.msra.mxu0 %v389
    %1777 = vmatprep.subr.mxu0 %v394
    %1778 = vmatpush1.msra.mxu0 %v393
    %1779 = vmatprep.subr.mxu0 %v398
    %1780 = vmatpush1.msra.mxu0 %v397
    %1781 = vmatprep.subr.mxu0 %v402
    %1782 = vmatpush1.msra.mxu0 %v401
    %1783 = vmatprep.subr.mxu0 %v406
    %1784 = vmatpush1.msra.mxu0 %v405
    %1785 = vmatprep.subr.mxu0 %v410
    %1786 = vmatpush1.msra.mxu0 %v409
    %1787 = vmatprep.subr.mxu0 %v414
    %1788 = vmatpush1.msra.mxu0 %v413
    %1789 = vmatprep.subr.mxu0 %v418
    %1790 = vmatpush1.msra.mxu0 %v417
    %1791 = vmatprep.subr.mxu0 %v422
    %1792 = vmatpush1.msra.mxu0 %v421
    %1793 = vmatprep.subr.mxu0 %v426
    %1794 = vmatpush1.msra.mxu0 %v425
    %1795 = vmatprep.subr.mxu0 %v430
    %1796 = vmatpush1.msra.mxu0 %v429
    %1797 = vmatprep.subr.mxu0 %v434
    %1798 = vmatpush1.msra.mxu0 %v433
    %1799 = vmatprep.subr.mxu0 0.0
    %1800 = vmatpush1.msra.mxu0 0.0
    %1801 = vmatprep.subr.mxu0 0.0
    %1802 = vmatpush1.msra.mxu0 0.0
    %1803 = vmatprep.subr.mxu0 0.0
    %1804 = vmatpush1.msra.mxu0 0.0
    %1805 = vmatprep.subr.mxu0 0.0
    %1806 = vmatpush1.msra.mxu0 0.0
    %1807 = vmatprep.subr.mxu0 0.0
    %1808 = vmatpush1.msra.mxu0 0.0
    %1809 = vmatprep.subr.mxu0 0.0
    %1810 = vmatpush1.msra.mxu0 0.0
    %1811 = vmatprep.subr.mxu0 0.0
    %1812 = vmatpush1.msra.mxu0 0.0
    %1813 = vmatprep.subr.mxu0 0.0
    %1814 = vmatpush1.msra.mxu0 0.0
    %1815 = vmatprep.subr.mxu0 0.0
    %1816 = vmatpush1.msra.mxu0 0.0
    %1817 = vmatprep.subr.mxu0 0.0
    %1818 = vmatpush1.msra.mxu0 0.0
    %1819 = vmatprep.subr.mxu0 0.0
    %1820 = vmatpush1.msra.mxu0 0.0
    %1821 = vmatprep.subr.mxu0 0.0
    %1822 = vmatpush1.msra.mxu0 0.0
    %1823 = vmatprep.subr.mxu0 0.0
    %1824 = vmatpush1.msra.mxu0 0.0
    %1825 = vmatprep.subr.mxu0 0.0
    %1826 = vmatpush1.msra.mxu0 0.0
    %1827 = vmatprep.subr.mxu0 0.0
    %1828 = vmatpush1.msra.mxu0 0.0
    %1829 = vmatprep.subr.mxu0 0.0
    %1830 = vmatpush1.msra.mxu0 0.0
    %1831 = vmatprep.mubr.f32.mxu0 0.0
    %1832 = vmatmul.mubr.f32.gmra.mrb[0].mxu0 %v1686
    %v1833 = vpop.f32.mrb[0].mxu0
    %v1834 = vadd.f32 0.0, %v1833
    %v1835 = vpop.f32.mrb[0].mxu0
    %v1836 = vadd.f32 0.0, %v1835
    %1837 = vdwg.mxu0
    %v1838 = vadd.f32 %v1692, %v1763
    %v1839 = vadd.f32 %v1693, %v1765
    %v1840 = vadd.f32 %v1694, %v1834
    %v1841 = vadd.f32 %v1695, %v1836
    %v1842 = vxor.u32 %v1838, 2147483648
    %v1843 = vmul.f32 %v1842, 1.442695
    %v1844 = vpow.pop %v1843
    %v1845 = vadd.f32 %v1844, 1.0
    %v1846 = vrcp.pop %v1845
    %v1847 = vmul.f32 1.0, %v1846
    %v1848 = vxor.u32 %v1839, 2147483648
    %v1849 = vmul.f32 %v1848, 1.442695
    %v1850 = vpow.pop %v1849
    %v1851 = vadd.f32 %v1850, 1.0
    %v1852 = vrcp.pop %v1851
    %v1853 = vmul.f32 1.0, %v1852
    %v1854 = vtanh.pop %v1840
    %v1855 = vxor.u32 %v1841, 2147483648
    %v1856 = vmul.f32 %v1855, 1.442695
    %v1857 = vpow.pop %v1856
    %v1858 = vadd.f32 %v1857, 1.0
    %v1859 = vrcp.pop %v1858
    %v1860 = vmul.f32 1.0, %v1859
    %v1861 = vmul.f32 %v1853, %v1684
    %v1862 = vmul.f32 %v1847, %v1854
    %v1863 = vadd.f32 %v1861, %v1862
    %v1864 = vtanh.pop %v1863
    %v1865 = vmul.f32 %v1860, %v1864
    %s1866 = scalar_lea.vmem [#allocation8], 56
    %1867 = vst [vmem:[%s1866] sm:$0xff] %v1865
    %1868 = vst [vmem:[#allocation2] sm:$0xff] %v1865
    %1869 = vst [vmem:[#allocation3] sm:$0xff] %v1863
    // Predicated region
    $region34: #{tpu_custom_call.1} parent=1 // pred_check
      %p1870 = pneg %p42
    $region35: #{tpu_custom_call.1} parent=1 // pred_check_branch
      %1872 = sbr.rel (%p1870) target = $region37
    $region36: #{tpu_custom_call.1} parent=1 // pred_region
      %1873 = vst [vmem:[#allocation9] sm:$0xff] %v1865
      %1874 = vst [vmem:[#allocation11] sm:$0xff] %v1863
    $region37: #{tpu_custom_call.1} parent=1 // pred_fallthru
      _
    // Predicated region
    $region38: #{tpu_custom_call.1} parent=1 // pred_check
      _
    $region39: #{tpu_custom_call.1} parent=1 // pred_check_branch
      %1876 = sbr.rel (0) target = $region41
    $region40: #{tpu_custom_call.1} parent=1 // pred_region
      %s1878 = ssub.s32 1024, 1024
      %1879 = vsyncadd [#allocation7], %s1878
      %s1880 = sshll.u32 [#allocation8], 4
      %s1881 = int_to_ptr.vmem [resolvable:$true] %s1880
      %1886 = dma.vmem_to_hbm [thread:$0]  %s1881, 1024, %s6, [#allocation7], 128, 128, 8
    $region41: #{tpu_custom_call.1} parent=1 // pred_fallthru
      _
    // Predicated region
    $region42: #{tpu_custom_call.1} parent=1 // pred_check
      _
    $region43: #{tpu_custom_call.1} parent=1 // pred_check_branch
      %1888 = sbr.rel (0) target = $region45
    $region44: #{tpu_custom_call.1} parent=1 // pred_region
      %s1890 = ssub.s32 128, 128
      %1891 = vsyncadd [#allocation10], %s1890
      %s1893 = sshll.u32 [#allocation9], 4
      %s1894 = int_to_ptr.vmem [resolvable:$true] %s1893
      %1896 = dma.vmem_to_hbm [thread:$0]  %s1894, 128, %s7, [#allocation10]
    $region45: #{tpu_custom_call.1} parent=1 // pred_fallthru
      _
    // Predicated region
    $region46: #{tpu_custom_call.1} parent=1 // pred_check
      _
    $region47: #{tpu_custom_call.1} parent=1 // pred_check_branch
      %1898 = sbr.rel (0) target = $region49
    $region48: #{tpu_custom_call.1} parent=1 // pred_region
      %s1900 = ssub.s32 128, 128
      %1901 = vsyncadd [#allocation10], %s1900
      %s1903 = sshll.u32 [#allocation11], 4
      %s1904 = int_to_ptr.vmem [resolvable:$true] %s1903
      %1906 = dma.vmem_to_hbm [thread:$0]  %s1904, 128, %s8, [#allocation10]
    $region49: #{tpu_custom_call.1} parent=1 // pred_fallthru
      _
    // Predicated region
    $region50: #{tpu_custom_call.1} parent=1 // pred_check
      _
    $region51: #{tpu_custom_call.1} parent=1 // pred_check_branch
      %1908 = sbr.rel (0) target = $region53
    $region52: #{tpu_custom_call.1} parent=1 // pred_region
      %1909 = dma.done [#allocation7], 1024
    $region53: #{tpu_custom_call.1} parent=1 // pred_fallthru
      _
    // Predicated region
    $region54: #{tpu_custom_call.1} parent=1 // pred_check
      _
    $region55: #{tpu_custom_call.1} parent=1 // pred_check_branch
      %1911 = sbr.rel (0) target = $region57
    $region56: #{tpu_custom_call.1} parent=1 // pred_region
      %1912 = dma.done [#allocation10], 128
    $region57: #{tpu_custom_call.1} parent=1 // pred_fallthru
      _
    // Predicated region
    $region58: #{tpu_custom_call.1} parent=1 // pred_check
      _
    $region59: #{tpu_custom_call.1} parent=1 // pred_check_branch
      %1914 = sbr.rel (0) target = $region61
    $region60: #{tpu_custom_call.1} parent=1 // pred_region
      %1915 = dma.done [#allocation10], 128
    $region61: #{tpu_custom_call.1} parent=1 // pred_fallthru
      _
    %1916 = vsyncpa [#allocation6], 1
    %1917 = vsyncpa [#allocation7], 1
    %1918 = vsyncpa [#allocation10], 1

</llo_original>
